<compile_context>
chip_gen: v5e
topology: v5e:2x2
jax: 0.10.0
libtpu: 0.0.40
codegen_flags: <defaults>
</compile_context>

<pallas_src>
import functools
import math

import jax
import jax.numpy as jnp
from jax.experimental import pallas as pl
from jax.experimental.pallas import tpu as pltpu

# ---- synthetic config (embedding_size == hidden_size -> no embeddings_project,
#      matching the PyTorch `hasattr(self, "embeddings_project")` branch) ----
VOCAB = 100
EMB = 32
HIDDEN = 32
NUM_HEADS = 4
HEAD_DIM = HIDDEN // NUM_HEADS
FFN = 4 * HIDDEN
NUM_LAYERS = 2
MAX_POS = 64
TYPE_VOCAB = 2
LN_EPS = 1e-12
QA_PAD = 128          # lane-dense padded width for the 2-wide qa-head output
NEG_INF = -1.0e9      # additive mask for cross-batch blocks in the fused attention


def _layernorm(x, g, b, eps=LN_EPS):
    u = jnp.mean(x, axis=-1, keepdims=True)
    s = jnp.mean(jnp.square(x - u), axis=-1, keepdims=True)
    return (x - u) * jax.lax.rsqrt(s + eps) * g + b          # rsqrt -> EUP slot


def _gelu(x):
    # matches torch `gelu` / `bias_gelu`: x * 0.5 * (1 + erf(x / 1.41421))
    return x * 0.5 * (1.0 + jax.lax.erf(x / 1.41421))


# ------------------------------------------------------------------
# Fused kernel: embeddings-LN + in-kernel layer loop + qa head.
# grid = (num_batch_blocks,); all weights resident in VMEM;
# activation carried as a fori_loop value (stays in vregs).
# ------------------------------------------------------------------
def fused_qa_kernel(num_heads, head_dim, bb, seq, num_layers,
                    emb_ref, bigmask_ref, rep_ref, rept_ref, hmask_ref,
                    elng_ref, elnb_ref,
                    wqkv_ref, bqkv_ref, wo_ref, bo_ref,
                    ln1g_ref, ln1b_ref,
                    w1_ref, b1_ref, w2_ref, b2_ref,
                    ln2g_ref, ln2b_ref,
                    qaw_ref, qab_ref,
                    out_ref):
    hidden = num_heads * head_dim
    rows = bb * seq
    scale = 1.0 / math.sqrt(head_dim)

    # Constant structure matrices, read once (hoisted out of the layer loop).
    rep = rep_ref[...]        # (bb*NH*S, rows): replicates each query row per head
    rep_t = rept_ref[...]     # (rows, bb*NH*S): folds per-head blocks back together
    hmask = hmask_ref[...]    # (bb*NH*S, H): 1 on the lanes belonging to the row's head
    bigmask = bigmask_ref[0]  # (bb*NH*S, rows): key padding mask + batch block-diagonal

    # ---- word+type+position embeddings already summed -> LayerNorm ----
    e = emb_ref[...].reshape(rows, hidden)
    h0 = _layernorm(e, elng_ref[...], elnb_ref[...])

    # ---- transformer layers: weights resident, loop in-kernel ----
    def layer(l, h):
        # fused QKV: single (rows, H) @ (H, 3H) matmul
        qkv = jnp.dot(h, wqkv_ref[l], preferred_element_type=jnp.float32) + bqkv_ref[l]
        q = qkv[:, :hidden]                 # whole 32-lane chunks (no odd lane offsets)
        k = qkv[:, hidden:2 * hidden]
        v = qkv[:, 2 * hidden:]

        # Block-diagonal multi-head attention: every (batch, head) pair handled by the
        # same score/softmax/context matmuls; head structure via hmask, batch structure
        # and key padding via the additive bigmask (cross-batch entries -> exp == 0).
        qs = jnp.dot(rep, q, preferred_element_type=jnp.float32) * hmask   # (bb*NH*S, H)
        s = jnp.dot(qs, k.T, preferred_element_type=jnp.float32) * scale + bigmask
        s = s - jnp.max(s, axis=-1, keepdims=True)
        p = jnp.exp(s)
        p = p * pl.reciprocal(jnp.sum(p, axis=-1, keepdims=True), approx=True)  # EUP
        ctx_full = jnp.dot(p, v, preferred_element_type=jnp.float32) * hmask
        ctx = jnp.dot(rep_t, ctx_full, preferred_element_type=jnp.float32)      # (rows, H)

        attn = jnp.dot(ctx, wo_ref[l], preferred_element_type=jnp.float32) + bo_ref[l]
        h1 = _layernorm(attn + h, ln1g_ref[l], ln1b_ref[l])

        inter = _gelu(jnp.dot(h1, w1_ref[l], preferred_element_type=jnp.float32)
                      + b1_ref[l])
        ff = jnp.dot(inter, w2_ref[l], preferred_element_type=jnp.float32) + b2_ref[l]
        return _layernorm(ff + h1, ln2g_ref[l], ln2b_ref[l])

    h = jax.lax.fori_loop(0, num_layers, layer, h0, unroll=True)

    # ---- QA head: lane-dense (padded to 128) output ----
    logits = jnp.dot(h, qaw_ref[...], preferred_element_type=jnp.float32) + qab_ref[...]
    out_ref[...] = logits.reshape(bb, seq, QA_PAD)


# ------------------------------------------------------------------
# Wrapper
# ------------------------------------------------------------------
def _num_tensorcores():
    """Batch blocks to run in parallel: one per TensorCore (v7x: 2, v5e/v6e: 1)."""
    try:
        kind = jax.devices()[0].device_kind.lower()
    except Exception:
        return 1
    return 2 if "7" in kind else 1


def electra_qa_forward(packed, input_ids, token_type_ids=None, attention_mask=None):
    B, S = input_ids.shape
    H, NH, D = HIDDEN, NUM_HEADS, HEAD_DIM
    if attention_mask is None:
        attention_mask = jnp.ones_like(input_ids)
    if token_type_ids is None:
        token_type_ids = jnp.zeros_like(input_ids)

    # plain-JAX prologue: embedding gathers + additive key mask
    emb = (packed["word_emb"][input_ids]
           + packed["type_emb"][token_type_ids]
           + packed["pos_emb"][:S][None, :, :]).astype(jnp.float32)        # (B,S,H)
    ext = (1.0 - attention_mask.astype(jnp.float32)) * -10000.0            # (B,S)

    # one batch block per TensorCore; pad batch so every core gets work (v7x)
    nb = _num_tensorcores()
    b_pad = ((B + nb - 1) // nb) * nb
    if b_pad != B:
        emb = jnp.concatenate([emb, jnp.zeros((b_pad - B, S, H), emb.dtype)], axis=0)
        ext = jnp.concatenate([ext, jnp.zeros((b_pad - B, S), ext.dtype)], axis=0)
    bb = b_pad // nb
    rows = bb * S              # resident-activation rows per batch block
    rr = bb * NH * S           # rows of the block-stacked per-head score matrix

    # constant structure matrices for the fused block-diagonal attention
    r_idx = jnp.arange(rr)
    c_idx = jnp.arange(rows)
    rep = ((r_idx[:, None] // (NH * S) == c_idx[None, :] // S) &
           (r_idx[:, None] % S == c_idx[None, :] % S)).astype(jnp.float32)   # (rr, rows)
    rep_t = rep.T                                                            # (rows, rr)
    hmask = ((r_idx[:, None] // S) % NH
             == jnp.arange(H)[None, :] // D).astype(jnp.float32)             # (rr, H)

    # additive key mask: padding mask on the own-batch block, NEG_INF across batches
    ext_blk = ext.reshape(nb, bb, S)
    same = jnp.arange(bb)[:, None] == jnp.arange(bb)[None, :]                # (bb, bb)
    big = jnp.where(same[None, :, None, None, :, None],
                    ext_blk[:, None, None, None, :, :],
                    jnp.float32(NEG_INF))
    bigmask = jnp.broadcast_to(big, (nb, bb, NH, S, bb, S)).reshape(nb, rr, rows)

    L = packed["wqkv"].shape[0]

    def resident(arr):     # whole array resident in VMEM, fetched once
        zeros = (0,) * arr.ndim
        return pl.BlockSpec(arr.shape, lambda i: zeros)

    weights = (packed["emb_ln_g"], packed["emb_ln_b"],
               packed["wqkv"], packed["bqkv"], packed["wo"], packed["bo"],
               packed["ln1_g"], packed["ln1_b"],
               packed["w1"], packed["b1"], packed["w2"], packed["b2"],
               packed["ln2_g"], packed["ln2_b"],
               packed["qa_w"], packed["qa_b"])

    in_specs = ([pl.BlockSpec((bb, S, H), lambda i: (i, 0, 0)),        # embeddings
                 pl.BlockSpec((1, rr, rows), lambda i: (i, 0, 0)),     # additive mask
                 resident(rep), resident(rep_t), resident(hmask)]
                + [resident(w) for w in weights])
    out_spec = pl.BlockSpec((bb, S, QA_PAD), lambda i: (i, 0, 0))

    logits_pad = pl.pallas_call(
        functools.partial(fused_qa_kernel, NH, D, bb, S, L),
        out_shape=jax.ShapeDtypeStruct((b_pad, S, QA_PAD), jnp.float32),
        grid=(nb,),
        in_specs=in_specs,
        out_specs=out_spec,
        compiler_params=pltpu.CompilerParams(dimension_semantics=("parallel",)),
    )(emb, bigmask, rep, rep_t, hmask, *weights)

    start_logits = logits_pad[:B, :, 0]     # == split(1, dim=-1) + squeeze(-1)
    end_logits = logits_pad[:B, :, 1]
    return start_logits, end_logits


# ------------------------------------------------------------------
# Parameters (deterministic, synthetic)
# ------------------------------------------------------------------
def init_params(key):
    keys = iter(jax.random.split(key, 64))

    def nrm(shape, std=0.02):
        return (std * jax.random.normal(next(keys), shape)).astype(jnp.float32)

    p = {}
    we = nrm((VOCAB, EMB))
    p["word_emb"] = we.at[0].set(0.0)           # padding_idx=0
    p["pos_emb"] = nrm((MAX_POS, EMB))
    p["type_emb"] = nrm((TYPE_VOCAB, EMB))
    p["emb_ln_g"] = jnp.ones((1, EMB), jnp.float32)
    p["emb_ln_b"] = jnp.zeros((1, EMB), jnp.float32)

    layers = []
    for _ in range(NUM_LAYERS):
        layers.append(dict(
            wq=nrm((HIDDEN, HIDDEN)), bq=jnp.zeros((1, HIDDEN), jnp.float32),
            wk=nrm((HIDDEN, HIDDEN)), bk=jnp.zeros((1, HIDDEN), jnp.float32),
            wv=nrm((HIDDEN, HIDDEN)), bv=jnp.zeros((1, HIDDEN), jnp.float32),
            wo=nrm((HIDDEN, HIDDEN)), bo=jnp.zeros((1, HIDDEN), jnp.float32),
            ln1_g=jnp.ones((1, HIDDEN), jnp.float32),
            ln1_b=jnp.zeros((1, HIDDEN), jnp.float32),
            w1=nrm((HIDDEN, FFN)), b1=nrm((1, FFN)),
            w2=nrm((FFN, HIDDEN)), b2=jnp.zeros((1, HIDDEN), jnp.float32),
            ln2_g=jnp.ones((1, HIDDEN), jnp.float32),
            ln2_b=jnp.zeros((1, HIDDEN), jnp.float32),
        ))
    p["layers"] = layers
    p["qa_w"] = nrm((HIDDEN, 2))
    p["qa_b"] = jnp.zeros((1, 2), jnp.float32)
    return p


def pack_params(p):
    """Stack per-layer weights along a leading L axis, fuse QKV, pad the qa head."""
    layers = p["layers"]
    stack = lambda name: jnp.stack([lp[name] for lp in layers])
    packed = {
        "word_emb": p["word_emb"], "type_emb": p["type_emb"], "pos_emb": p["pos_emb"],
        "emb_ln_g": p["emb_ln_g"], "emb_ln_b": p["emb_ln_b"],
        "wqkv": jnp.stack([jnp.concatenate([lp["wq"], lp["wk"], lp["wv"]], axis=1)
                           for lp in layers]),
        "bqkv": jnp.stack([jnp.concatenate([lp["bq"], lp["bk"], lp["bv"]], axis=1)
                           for lp in layers]),
        "wo": stack("wo"), "bo": stack("bo"),
        "ln1_g": stack("ln1_g"), "ln1_b": stack("ln1_b"),
        "w1": stack("w1"), "b1": stack("b1"),
        "w2": stack("w2"), "b2": stack("b2"),
        "ln2_g": stack("ln2_g"), "ln2_b": stack("ln2_b"),
        "qa_w": jnp.concatenate(
            [p["qa_w"], jnp.zeros((HIDDEN, QA_PAD - 2), jnp.float32)], axis=1),
        "qa_b": jnp.concatenate(
            [p["qa_b"], jnp.zeros((1, QA_PAD - 2), jnp.float32)], axis=1),
    }
    return packed


# ------------------------------------------------------------------
# Pure-JAX reference (for correctness check)
# ------------------------------------------------------------------
def ref_forward(params, input_ids, token_type_ids, attention_mask):
    def ln(x, g, b, eps=LN_EPS):
        u = jnp.mean(x, axis=-1, keepdims=True)
        s = jnp.mean((x - u) ** 2, axis=-1, keepdims=True)
        return g * ((x - u) / jnp.sqrt(s + eps)) + b

    B, S = input_ids.shape
    mask_add = ((1.0 - attention_mask.astype(jnp.float32)) * -10000.0)[:, None, None, :]
    pos = jnp.arange(S)
    e = (params["word_emb"][input_ids]
         + params["pos_emb"][pos][None]
         + params["type_emb"][token_type_ids])
    h = ln(e, params["emb_ln_g"][0], params["emb_ln_b"][0])
    for lp in params["layers"]:
        q = h @ lp["wq"] + lp["bq"][0]
        k = h @ lp["wk"] + lp["bk"][0]
        v = h @ lp["wv"] + lp["bv"][0]
        split = lambda t: t.reshape(B, S, NUM_HEADS, HEAD_DIM).transpose(0, 2, 1, 3)
        qh, kh, vh = split(q), split(k), split(v)
        s = jnp.einsum("bhqd,bhkd->bhqk", qh, kh) / math.sqrt(HEAD_DIM) + mask_add
        p = jax.nn.softmax(s, axis=-1)
        ctx = jnp.einsum("bhqk,bhkd->bhqd", p, vh).transpose(0, 2, 1, 3).reshape(B, S, HIDDEN)
        attn = ctx @ lp["wo"] + lp["bo"][0]
        h1 = ln(attn + h, lp["ln1_g"][0], lp["ln1_b"][0])
        inter = _gelu(h1 @ lp["w1"] + lp["b1"][0])
        ff = inter @ lp["w2"] + lp["b2"][0]
        h = ln(ff + h1, lp["ln2_g"][0], lp["ln2_b"][0])
    logits = h @ params["qa_w"] + params["qa_b"][0]
    return logits[..., 0], logits[..., 1]


if __name__ == "__main__":
    key = jax.random.PRNGKey(0)
    pkey, dkey = jax.random.split(key)
    params = init_params(pkey)
    packed = pack_params(params)

    B, S = 2, 8
    input_ids = jax.random.randint(dkey, (B, S), 1, VOCAB)
    token_type_ids = jnp.concatenate(
        [jnp.zeros((B, S // 2), jnp.int32), jnp.ones((B, S // 2), jnp.int32)], axis=1)
    attention_mask = jnp.ones((B, S), jnp.int32).at[1, -2:].set(0)

    start_logits, end_logits = electra_qa_forward(
        packed, input_ids, token_type_ids, attention_mask)
    jax.block_until_ready((start_logits, end_logits))

    ref_s, ref_e = ref_forward(params, input_ids, token_type_ids, attention_mask)
    assert start_logits.shape == (B, S) and end_logits.shape == (B, S)
    # tolerance loosened slightly because of the approx-EUP softmax reciprocal
    assert jnp.allclose(start_logits, ref_s, atol=5e-3), float(jnp.max(jnp.abs(start_logits - ref_s)))
    assert jnp.allclose(end_logits, ref_e, atol=5e-3), float(jnp.max(jnp.abs(end_logits - ref_e)))

    # TODO(synk): loss branch (CrossEntropyLoss with start/end positions) not ported;
    # only the inference path (start_logits, end_logits) is implemented.
    print("KERNEL_OK")
</pallas_src>

<mosaic_0001>
module attributes {stable_mosaic.version = 11 : i64} {
  func.func @fused_qa_kernel(%arg0: i32, %arg1: memref<2x8x32xf32, #tpu.memory_space<vmem>>, %arg2: memref<1x64x16xf32, #tpu.memory_space<vmem>>, %arg3: memref<64x16xf32, #tpu.memory_space<vmem>>, %arg4: memref<16x64xf32, #tpu.memory_space<vmem>>, %arg5: memref<64x32xf32, #tpu.memory_space<vmem>>, %arg6: memref<1x32xf32, #tpu.memory_space<vmem>>, %arg7: memref<1x32xf32, #tpu.memory_space<vmem>>, %arg8: memref<2x32x96xf32, #tpu.memory_space<vmem>>, %arg9: memref<2x1x96xf32, #tpu.memory_space<vmem>>, %arg10: memref<2x32x32xf32, #tpu.memory_space<vmem>>, %arg11: memref<2x1x32xf32, #tpu.memory_space<vmem>>, %arg12: memref<2x1x32xf32, #tpu.memory_space<vmem>>, %arg13: memref<2x1x32xf32, #tpu.memory_space<vmem>>, %arg14: memref<2x32x128xf32, #tpu.memory_space<vmem>>, %arg15: memref<2x1x128xf32, #tpu.memory_space<vmem>>, %arg16: memref<2x128x32xf32, #tpu.memory_space<vmem>>, %arg17: memref<2x1x32xf32, #tpu.memory_space<vmem>>, %arg18: memref<2x1x32xf32, #tpu.memory_space<vmem>>, %arg19: memref<2x1x32xf32, #tpu.memory_space<vmem>>, %arg20: memref<32x128xf32, #tpu.memory_space<vmem>>, %arg21: memref<1x128xf32, #tpu.memory_space<vmem>>, %arg22: memref<2x8x128xf32, #tpu.memory_space<vmem>>) attributes {dimension_semantics = [#tpu.dimension_semantics<parallel>], iteration_bounds = array<i64: 1>, scalar_prefetch = 0 : i64, scratch_operands = 0 : i64, tpu.core_type = #tpu.core_type<tc>, window_params = [{transform_indices = @transform_0, window_bounds = array<i64: 2, 8, 32>}, {transform_indices = @transform_1, window_bounds = array<i64: 1, 64, 16>}, {pipeline_mode = #tpu.pipeline_mode<synchronous>, transform_indices = @transform_2, window_bounds = array<i64: 64, 16>}, {pipeline_mode = #tpu.pipeline_mode<synchronous>, transform_indices = @transform_3, window_bounds = array<i64: 16, 64>}, {pipeline_mode = #tpu.pipeline_mode<synchronous>, transform_indices = @transform_4, window_bounds = array<i64: 64, 32>}, {pipeline_mode = #tpu.pipeline_mode<synchronous>, transform_indices = @transform_5, window_bounds = array<i64: 1, 32>}, {pipeline_mode = #tpu.pipeline_mode<synchronous>, transform_indices = @transform_6, window_bounds = array<i64: 1, 32>}, {pipeline_mode = #tpu.pipeline_mode<synchronous>, transform_indices = @transform_7, window_bounds = array<i64: 2, 32, 96>}, {pipeline_mode = #tpu.pipeline_mode<synchronous>, transform_indices = @transform_8, window_bounds = array<i64: 2, 1, 96>}, {pipeline_mode = #tpu.pipeline_mode<synchronous>, transform_indices = @transform_9, window_bounds = array<i64: 2, 32, 32>}, {pipeline_mode = #tpu.pipeline_mode<synchronous>, transform_indices = @transform_10, window_bounds = array<i64: 2, 1, 32>}, {pipeline_mode = #tpu.pipeline_mode<synchronous>, transform_indices = @transform_11, window_bounds = array<i64: 2, 1, 32>}, {pipeline_mode = #tpu.pipeline_mode<synchronous>, transform_indices = @transform_12, window_bounds = array<i64: 2, 1, 32>}, {pipeline_mode = #tpu.pipeline_mode<synchronous>, transform_indices = @transform_13, window_bounds = array<i64: 2, 32, 128>}, {pipeline_mode = #tpu.pipeline_mode<synchronous>, transform_indices = @transform_14, window_bounds = array<i64: 2, 1, 128>}, {pipeline_mode = #tpu.pipeline_mode<synchronous>, transform_indices = @transform_15, window_bounds = array<i64: 2, 128, 32>}, {pipeline_mode = #tpu.pipeline_mode<synchronous>, transform_indices = @transform_16, window_bounds = array<i64: 2, 1, 32>}, {pipeline_mode = #tpu.pipeline_mode<synchronous>, transform_indices = @transform_17, window_bounds = array<i64: 2, 1, 32>}, {pipeline_mode = #tpu.pipeline_mode<synchronous>, transform_indices = @transform_18, window_bounds = array<i64: 2, 1, 32>}, {pipeline_mode = #tpu.pipeline_mode<synchronous>, transform_indices = @transform_19, window_bounds = array<i64: 32, 128>}, {pipeline_mode = #tpu.pipeline_mode<synchronous>, transform_indices = @transform_20, window_bounds = array<i64: 1, 128>}, {transform_indices = @transform_21, window_bounds = array<i64: 2, 8, 128>}]} {
    %c0 = arith.constant 0 : index
    %c0_0 = arith.constant 0 : index
    %0 = vector.load %arg3[%c0, %c0_0] : memref<64x16xf32, #tpu.memory_space<vmem>>, vector<64x16xf32>
    %c0_1 = arith.constant 0 : index
    %c0_2 = arith.constant 0 : index
    %1 = vector.load %arg4[%c0_1, %c0_2] : memref<16x64xf32, #tpu.memory_space<vmem>>, vector<16x64xf32>
    %c0_3 = arith.constant 0 : index
    %c0_4 = arith.constant 0 : index
    %2 = vector.load %arg5[%c0_3, %c0_4] : memref<64x32xf32, #tpu.memory_space<vmem>>, vector<64x32xf32>
    %c0_5 = arith.constant 0 : index
    %c0_6 = arith.constant 0 : index
    %c0_7 = arith.constant 0 : index
    %3 = vector.load %arg2[%c0_5, %c0_6, %c0_7] : memref<1x64x16xf32, #tpu.memory_space<vmem>>, vector<1x64x16xf32>
    %4 = vector.shape_cast %3 : vector<1x64x16xf32> to vector<64x16xf32>
    %c0_8 = arith.constant 0 : index
    %c0_9 = arith.constant 0 : index
    %c0_10 = arith.constant 0 : index
    %5 = vector.load %arg1[%c0_8, %c0_9, %c0_10] : memref<2x8x32xf32, #tpu.memory_space<vmem>>, vector<2x8x32xf32>
    %6 = vector.shape_cast %5 : vector<2x8x32xf32> to vector<16x32xf32>
    %c0_11 = arith.constant 0 : index
    %c0_12 = arith.constant 0 : index
    %7 = vector.load %arg6[%c0_11, %c0_12] : memref<1x32xf32, #tpu.memory_space<vmem>>, vector<1x32xf32>
    %c0_13 = arith.constant 0 : index
    %c0_14 = arith.constant 0 : index
    %8 = vector.load %arg7[%c0_13, %c0_14] : memref<1x32xf32, #tpu.memory_space<vmem>>, vector<1x32xf32>
    %cst = arith.constant dense<0.000000e+00> : vector<16xf32>
    %9 = vector.multi_reduction <add>, %6, %cst [1] : vector<16x32xf32> to vector<16xf32>
    %10 = vector.shape_cast %9 : vector<16xf32> to vector<16x1xf32>
    %cst_15 = arith.constant 3.200000e+01 : f32
    %11 = vector.broadcast %cst_15 : f32 to vector<16x1xf32>
    %12 = arith.divf %10, %11 : vector<16x1xf32>
    %13 = vector.broadcast %12 : vector<16x1xf32> to vector<16x32xf32>
    %14 = arith.subf %6, %13 : vector<16x32xf32>
    %15 = arith.mulf %14, %14 : vector<16x32xf32>
    %cst_16 = arith.constant dense<0.000000e+00> : vector<16xf32>
    %16 = vector.multi_reduction <add>, %15, %cst_16 [1] : vector<16x32xf32> to vector<16xf32>
    %17 = vector.shape_cast %16 : vector<16xf32> to vector<16x1xf32>
    %cst_17 = arith.constant 3.200000e+01 : f32
    %18 = vector.broadcast %cst_17 : f32 to vector<16x1xf32>
    %19 = arith.divf %17, %18 : vector<16x1xf32>
    %20 = vector.broadcast %12 : vector<16x1xf32> to vector<16x32xf32>
    %21 = arith.subf %6, %20 : vector<16x32xf32>
    %cst_18 = arith.constant 9.99999996E-13 : f32
    %22 = vector.broadcast %cst_18 : f32 to vector<16x1xf32>
    %23 = arith.addf %19, %22 : vector<16x1xf32>
    %24 = math.rsqrt %23 : vector<16x1xf32>
    %25 = vector.broadcast %24 : vector<16x1xf32> to vector<16x32xf32>
    %26 = arith.mulf %21, %25 : vector<16x32xf32>
    %27 = vector.broadcast %7 : vector<1x32xf32> to vector<16x32xf32>
    %28 = arith.mulf %26, %27 : vector<16x32xf32>
    %29 = vector.broadcast %8 : vector<1x32xf32> to vector<16x32xf32>
    %30 = arith.addf %28, %29 : vector<16x32xf32>
    %c0_i32 = arith.constant 0 : i32
    %31 = arith.index_cast %c0_i32 : i32 to index
    %c0_19 = arith.constant 0 : index
    %c0_20 = arith.constant 0 : index
    %32 = vector.load %arg8[%31, %c0_19, %c0_20] : memref<2x32x96xf32, #tpu.memory_space<vmem>>, vector<1x32x96xf32>
    %33 = vector.shape_cast %32 : vector<1x32x96xf32> to vector<32x96xf32>
    %cst_21 = arith.constant dense<0.000000e+00> : vector<16x96xf32>
    %34 = tpu.matmul %30, %33, %cst_21 {dimension_numbers = #tpu.dot_dimension_numbers<[1], [0], [0], [1], [0, 0, 1, 1], [], []>} : vector<16x32xf32>, vector<32x96xf32>, vector<16x96xf32> -> vector<16x96xf32>
    %35 = arith.index_cast %c0_i32 : i32 to index
    %c0_22 = arith.constant 0 : index
    %c0_23 = arith.constant 0 : index
    %36 = vector.load %arg9[%35, %c0_22, %c0_23] : memref<2x1x96xf32, #tpu.memory_space<vmem>>, vector<1x1x96xf32>
    %37 = vector.shape_cast %36 : vector<1x1x96xf32> to vector<1x96xf32>
    %38 = vector.broadcast %37 : vector<1x96xf32> to vector<16x96xf32>
    %39 = arith.addf %34, %38 : vector<16x96xf32>
    %40 = vector.extract_strided_slice %39 {offsets = [0, 0], sizes = [16, 32], strides = [1, 1]} : vector<16x96xf32> to vector<16x32xf32>
    %41 = vector.extract_strided_slice %39 {offsets = [0, 32], sizes = [16, 32], strides = [1, 1]} : vector<16x96xf32> to vector<16x32xf32>
    %42 = vector.extract_strided_slice %39 {offsets = [0, 64], sizes = [16, 32], strides = [1, 1]} : vector<16x96xf32> to vector<16x32xf32>
    %cst_24 = arith.constant dense<0.000000e+00> : vector<64x32xf32>
    %43 = tpu.matmul %0, %40, %cst_24 {dimension_numbers = #tpu.dot_dimension_numbers<[1], [0], [0], [1], [0, 0, 1, 1], [], []>} : vector<64x16xf32>, vector<16x32xf32>, vector<64x32xf32> -> vector<64x32xf32>
    %44 = arith.mulf %43, %2 : vector<64x32xf32>
    %45 = tpu.transpose %41, [1, 0] : vector<16x32xf32> -> vector<32x16xf32>
    %cst_25 = arith.constant dense<0.000000e+00> : vector<64x16xf32>
    %46 = tpu.matmul %44, %45, %cst_25 {dimension_numbers = #tpu.dot_dimension_numbers<[1], [0], [0], [1], [0, 0, 1, 1], [], []>} : vector<64x32xf32>, vector<32x16xf32>, vector<64x16xf32> -> vector<64x16xf32>
    %cst_26 = arith.constant 0.353553385 : f32
    %47 = vector.broadcast %cst_26 : f32 to vector<64x16xf32>
    %48 = arith.mulf %46, %47 : vector<64x16xf32>
    %49 = arith.addf %48, %4 : vector<64x16xf32>
    %cst_27 = arith.constant dense<0xFF800000> : vector<64xf32>
    %50 = vector.multi_reduction <maximumf>, %49, %cst_27 [1] : vector<64x16xf32> to vector<64xf32>
    %51 = vector.shape_cast %50 : vector<64xf32> to vector<64x1xf32>
    %52 = vector.broadcast %51 : vector<64x1xf32> to vector<64x16xf32>
    %53 = arith.subf %49, %52 : vector<64x16xf32>
    %54 = math.exp %53 : vector<64x16xf32>
    %cst_28 = arith.constant dense<0.000000e+00> : vector<64xf32>
    %55 = vector.multi_reduction <add>, %54, %cst_28 [1] : vector<64x16xf32> to vector<64xf32>
    %56 = vector.shape_cast %55 : vector<64xf32> to vector<64x1xf32>
    %57 = tpu.reciprocal %56 {approx = true} : vector<64x1xf32> -> vector<64x1xf32>
    %58 = vector.broadcast %57 : vector<64x1xf32> to vector<64x16xf32>
    %59 = arith.mulf %54, %58 : vector<64x16xf32>
    %cst_29 = arith.constant dense<0.000000e+00> : vector<64x32xf32>
    %60 = tpu.matmul %59, %42, %cst_29 {dimension_numbers = #tpu.dot_dimension_numbers<[1], [0], [0], [1], [0, 0, 1, 1], [], []>} : vector<64x16xf32>, vector<16x32xf32>, vector<64x32xf32> -> vector<64x32xf32>
    %61 = arith.mulf %60, %2 : vector<64x32xf32>
    %cst_30 = arith.constant dense<0.000000e+00> : vector<16x32xf32>
    %62 = tpu.matmul %1, %61, %cst_30 {dimension_numbers = #tpu.dot_dimension_numbers<[1], [0], [0], [1], [0, 0, 1, 1], [], []>} : vector<16x64xf32>, vector<64x32xf32>, vector<16x32xf32> -> vector<16x32xf32>
    %63 = arith.index_cast %c0_i32 : i32 to index
    %c0_31 = arith.constant 0 : index
    %c0_32 = arith.constant 0 : index
    %64 = vector.load %arg10[%63, %c0_31, %c0_32] : memref<2x32x32xf32, #tpu.memory_space<vmem>>, vector<1x32x32xf32>
    %65 = vector.shape_cast %64 : vector<1x32x32xf32> to vector<32x32xf32>
    %cst_33 = arith.constant dense<0.000000e+00> : vector<16x32xf32>
    %66 = tpu.matmul %62, %65, %cst_33 {dimension_numbers = #tpu.dot_dimension_numbers<[1], [0], [0], [1], [0, 0, 1, 1], [], []>} : vector<16x32xf32>, vector<32x32xf32>, vector<16x32xf32> -> vector<16x32xf32>
    %67 = arith.index_cast %c0_i32 : i32 to index
    %c0_34 = arith.constant 0 : index
    %c0_35 = arith.constant 0 : index
    %68 = vector.load %arg11[%67, %c0_34, %c0_35] : memref<2x1x32xf32, #tpu.memory_space<vmem>>, vector<1x1x32xf32>
    %69 = vector.shape_cast %68 : vector<1x1x32xf32> to vector<1x32xf32>
    %70 = vector.broadcast %69 : vector<1x32xf32> to vector<16x32xf32>
    %71 = arith.addf %66, %70 : vector<16x32xf32>
    %72 = arith.addf %71, %30 : vector<16x32xf32>
    %73 = arith.index_cast %c0_i32 : i32 to index
    %c0_36 = arith.constant 0 : index
    %c0_37 = arith.constant 0 : index
    %74 = vector.load %arg12[%73, %c0_36, %c0_37] : memref<2x1x32xf32, #tpu.memory_space<vmem>>, vector<1x1x32xf32>
    %75 = vector.shape_cast %74 : vector<1x1x32xf32> to vector<1x32xf32>
    %76 = arith.index_cast %c0_i32 : i32 to index
    %c0_38 = arith.constant 0 : index
    %c0_39 = arith.constant 0 : index
    %77 = vector.load %arg13[%76, %c0_38, %c0_39] : memref<2x1x32xf32, #tpu.memory_space<vmem>>, vector<1x1x32xf32>
    %78 = vector.shape_cast %77 : vector<1x1x32xf32> to vector<1x32xf32>
    %cst_40 = arith.constant dense<0.000000e+00> : vector<16xf32>
    %79 = vector.multi_reduction <add>, %72, %cst_40 [1] : vector<16x32xf32> to vector<16xf32>
    %80 = vector.shape_cast %79 : vector<16xf32> to vector<16x1xf32>
    %cst_41 = arith.constant 3.200000e+01 : f32
    %81 = vector.broadcast %cst_41 : f32 to vector<16x1xf32>
    %82 = arith.divf %80, %81 : vector<16x1xf32>
    %83 = vector.broadcast %82 : vector<16x1xf32> to vector<16x32xf32>
    %84 = arith.subf %72, %83 : vector<16x32xf32>
    %85 = arith.mulf %84, %84 : vector<16x32xf32>
    %cst_42 = arith.constant dense<0.000000e+00> : vector<16xf32>
    %86 = vector.multi_reduction <add>, %85, %cst_42 [1] : vector<16x32xf32> to vector<16xf32>
    %87 = vector.shape_cast %86 : vector<16xf32> to vector<16x1xf32>
    %cst_43 = arith.constant 3.200000e+01 : f32
    %88 = vector.broadcast %cst_43 : f32 to vector<16x1xf32>
    %89 = arith.divf %87, %88 : vector<16x1xf32>
    %90 = vector.broadcast %82 : vector<16x1xf32> to vector<16x32xf32>
    %91 = arith.subf %72, %90 : vector<16x32xf32>
    %cst_44 = arith.constant 9.99999996E-13 : f32
    %92 = vector.broadcast %cst_44 : f32 to vector<16x1xf32>
    %93 = arith.addf %89, %92 : vector<16x1xf32>
    %94 = math.rsqrt %93 : vector<16x1xf32>
    %95 = vector.broadcast %94 : vector<16x1xf32> to vector<16x32xf32>
    %96 = arith.mulf %91, %95 : vector<16x32xf32>
    %97 = vector.broadcast %75 : vector<1x32xf32> to vector<16x32xf32>
    %98 = arith.mulf %96, %97 : vector<16x32xf32>
    %99 = vector.broadcast %78 : vector<1x32xf32> to vector<16x32xf32>
    %100 = arith.addf %98, %99 : vector<16x32xf32>
    %101 = arith.index_cast %c0_i32 : i32 to index
    %c0_45 = arith.constant 0 : index
    %c0_46 = arith.constant 0 : index
    %102 = vector.load %arg14[%101, %c0_45, %c0_46] : memref<2x32x128xf32, #tpu.memory_space<vmem>>, vector<1x32x128xf32>
    %103 = vector.shape_cast %102 : vector<1x32x128xf32> to vector<32x128xf32>
    %cst_47 = arith.constant dense<0.000000e+00> : vector<16x128xf32>
    %104 = tpu.matmul %100, %103, %cst_47 {dimension_numbers = #tpu.dot_dimension_numbers<[1], [0], [0], [1], [0, 0, 1, 1], [], []>} : vector<16x32xf32>, vector<32x128xf32>, vector<16x128xf32> -> vector<16x128xf32>
    %105 = arith.index_cast %c0_i32 : i32 to index
    %c0_48 = arith.constant 0 : index
    %c0_49 = arith.constant 0 : index
    %106 = vector.load %arg15[%105, %c0_48, %c0_49] : memref<2x1x128xf32, #tpu.memory_space<vmem>>, vector<1x1x128xf32>
    %107 = vector.shape_cast %106 : vector<1x1x128xf32> to vector<1x128xf32>
    %108 = vector.broadcast %107 : vector<1x128xf32> to vector<16x128xf32>
    %109 = arith.addf %104, %108 : vector<16x128xf32>
    %cst_50 = arith.constant 5.000000e-01 : f32
    %110 = vector.broadcast %cst_50 : f32 to vector<16x128xf32>
    %111 = arith.mulf %109, %110 : vector<16x128xf32>
    %cst_51 = arith.constant 1.414210e+00 : f32
    %112 = vector.broadcast %cst_51 : f32 to vector<16x128xf32>
    %113 = arith.divf %109, %112 : vector<16x128xf32>
    %114 = math.erf %113 : vector<16x128xf32>
    %cst_52 = arith.constant 1.000000e+00 : f32
    %115 = vector.broadcast %cst_52 : f32 to vector<16x128xf32>
    %116 = arith.addf %115, %114 : vector<16x128xf32>
    %117 = arith.mulf %111, %116 : vector<16x128xf32>
    %118 = arith.index_cast %c0_i32 : i32 to index
    %c0_53 = arith.constant 0 : index
    %c0_54 = arith.constant 0 : index
    %119 = vector.load %arg16[%118, %c0_53, %c0_54] : memref<2x128x32xf32, #tpu.memory_space<vmem>>, vector<1x128x32xf32>
    %120 = vector.shape_cast %119 : vector<1x128x32xf32> to vector<128x32xf32>
    %cst_55 = arith.constant dense<0.000000e+00> : vector<16x32xf32>
    %121 = tpu.matmul %117, %120, %cst_55 {dimension_numbers = #tpu.dot_dimension_numbers<[1], [0], [0], [1], [0, 0, 1, 1], [], []>} : vector<16x128xf32>, vector<128x32xf32>, vector<16x32xf32> -> vector<16x32xf32>
    %122 = arith.index_cast %c0_i32 : i32 to index
    %c0_56 = arith.constant 0 : index
    %c0_57 = arith.constant 0 : index
    %123 = vector.load %arg17[%122, %c0_56, %c0_57] : memref<2x1x32xf32, #tpu.memory_space<vmem>>, vector<1x1x32xf32>
    %124 = vector.shape_cast %123 : vector<1x1x32xf32> to vector<1x32xf32>
    %125 = vector.broadcast %124 : vector<1x32xf32> to vector<16x32xf32>
    %126 = arith.addf %121, %125 : vector<16x32xf32>
    %127 = arith.addf %126, %100 : vector<16x32xf32>
    %128 = arith.index_cast %c0_i32 : i32 to index
    %c0_58 = arith.constant 0 : index
    %c0_59 = arith.constant 0 : index
    %129 = vector.load %arg18[%128, %c0_58, %c0_59] : memref<2x1x32xf32, #tpu.memory_space<vmem>>, vector<1x1x32xf32>
    %130 = vector.shape_cast %129 : vector<1x1x32xf32> to vector<1x32xf32>
    %131 = arith.index_cast %c0_i32 : i32 to index
    %c0_60 = arith.constant 0 : index
    %c0_61 = arith.constant 0 : index
    %132 = vector.load %arg19[%131, %c0_60, %c0_61] : memref<2x1x32xf32, #tpu.memory_space<vmem>>, vector<1x1x32xf32>
    %133 = vector.shape_cast %132 : vector<1x1x32xf32> to vector<1x32xf32>
    %cst_62 = arith.constant dense<0.000000e+00> : vector<16xf32>
    %134 = vector.multi_reduction <add>, %127, %cst_62 [1] : vector<16x32xf32> to vector<16xf32>
    %135 = vector.shape_cast %134 : vector<16xf32> to vector<16x1xf32>
    %cst_63 = arith.constant 3.200000e+01 : f32
    %136 = vector.broadcast %cst_63 : f32 to vector<16x1xf32>
    %137 = arith.divf %135, %136 : vector<16x1xf32>
    %138 = vector.broadcast %137 : vector<16x1xf32> to vector<16x32xf32>
    %139 = arith.subf %127, %138 : vector<16x32xf32>
    %140 = arith.mulf %139, %139 : vector<16x32xf32>
    %cst_64 = arith.constant dense<0.000000e+00> : vector<16xf32>
    %141 = vector.multi_reduction <add>, %140, %cst_64 [1] : vector<16x32xf32> to vector<16xf32>
    %142 = vector.shape_cast %141 : vector<16xf32> to vector<16x1xf32>
    %cst_65 = arith.constant 3.200000e+01 : f32
    %143 = vector.broadcast %cst_65 : f32 to vector<16x1xf32>
    %144 = arith.divf %142, %143 : vector<16x1xf32>
    %145 = vector.broadcast %137 : vector<16x1xf32> to vector<16x32xf32>
    %146 = arith.subf %127, %145 : vector<16x32xf32>
    %cst_66 = arith.constant 9.99999996E-13 : f32
    %147 = vector.broadcast %cst_66 : f32 to vector<16x1xf32>
    %148 = arith.addf %144, %147 : vector<16x1xf32>
    %149 = math.rsqrt %148 : vector<16x1xf32>
    %150 = vector.broadcast %149 : vector<16x1xf32> to vector<16x32xf32>
    %151 = arith.mulf %146, %150 : vector<16x32xf32>
    %152 = vector.broadcast %130 : vector<1x32xf32> to vector<16x32xf32>
    %153 = arith.mulf %151, %152 : vector<16x32xf32>
    %154 = vector.broadcast %133 : vector<1x32xf32> to vector<16x32xf32>
    %155 = arith.addf %153, %154 : vector<16x32xf32>
    %c1_i32 = arith.constant 1 : i32
    %156 = arith.index_cast %c1_i32 : i32 to index
    %c0_67 = arith.constant 0 : index
    %c0_68 = arith.constant 0 : index
    %157 = vector.load %arg8[%156, %c0_67, %c0_68] : memref<2x32x96xf32, #tpu.memory_space<vmem>>, vector<1x32x96xf32>
    %158 = vector.shape_cast %157 : vector<1x32x96xf32> to vector<32x96xf32>
    %cst_69 = arith.constant dense<0.000000e+00> : vector<16x96xf32>
    %159 = tpu.matmul %155, %158, %cst_69 {dimension_numbers = #tpu.dot_dimension_numbers<[1], [0], [0], [1], [0, 0, 1, 1], [], []>} : vector<16x32xf32>, vector<32x96xf32>, vector<16x96xf32> -> vector<16x96xf32>
    %160 = arith.index_cast %c1_i32 : i32 to index
    %c0_70 = arith.constant 0 : index
    %c0_71 = arith.constant 0 : index
    %161 = vector.load %arg9[%160, %c0_70, %c0_71] : memref<2x1x96xf32, #tpu.memory_space<vmem>>, vector<1x1x96xf32>
    %162 = vector.shape_cast %161 : vector<1x1x96xf32> to vector<1x96xf32>
    %163 = vector.broadcast %162 : vector<1x96xf32> to vector<16x96xf32>
    %164 = arith.addf %159, %163 : vector<16x96xf32>
    %165 = vector.extract_strided_slice %164 {offsets = [0, 0], sizes = [16, 32], strides = [1, 1]} : vector<16x96xf32> to vector<16x32xf32>
    %166 = vector.extract_strided_slice %164 {offsets = [0, 32], sizes = [16, 32], strides = [1, 1]} : vector<16x96xf32> to vector<16x32xf32>
    %167 = vector.extract_strided_slice %164 {offsets = [0, 64], sizes = [16, 32], strides = [1, 1]} : vector<16x96xf32> to vector<16x32xf32>
    %cst_72 = arith.constant dense<0.000000e+00> : vector<64x32xf32>
    %168 = tpu.matmul %0, %165, %cst_72 {dimension_numbers = #tpu.dot_dimension_numbers<[1], [0], [0], [1], [0, 0, 1, 1], [], []>} : vector<64x16xf32>, vector<16x32xf32>, vector<64x32xf32> -> vector<64x32xf32>
    %169 = arith.mulf %168, %2 : vector<64x32xf32>
    %170 = tpu.transpose %166, [1, 0] : vector<16x32xf32> -> vector<32x16xf32>
    %cst_73 = arith.constant dense<0.000000e+00> : vector<64x16xf32>
    %171 = tpu.matmul %169, %170, %cst_73 {dimension_numbers = #tpu.dot_dimension_numbers<[1], [0], [0], [1], [0, 0, 1, 1], [], []>} : vector<64x32xf32>, vector<32x16xf32>, vector<64x16xf32> -> vector<64x16xf32>
    %cst_74 = arith.constant 0.353553385 : f32
    %172 = vector.broadcast %cst_74 : f32 to vector<64x16xf32>
    %173 = arith.mulf %171, %172 : vector<64x16xf32>
    %174 = arith.addf %173, %4 : vector<64x16xf32>
    %cst_75 = arith.constant dense<0xFF800000> : vector<64xf32>
    %175 = vector.multi_reduction <maximumf>, %174, %cst_75 [1] : vector<64x16xf32> to vector<64xf32>
    %176 = vector.shape_cast %175 : vector<64xf32> to vector<64x1xf32>
    %177 = vector.broadcast %176 : vector<64x1xf32> to vector<64x16xf32>
    %178 = arith.subf %174, %177 : vector<64x16xf32>
    %179 = math.exp %178 : vector<64x16xf32>
    %cst_76 = arith.constant dense<0.000000e+00> : vector<64xf32>
    %180 = vector.multi_reduction <add>, %179, %cst_76 [1] : vector<64x16xf32> to vector<64xf32>
    %181 = vector.shape_cast %180 : vector<64xf32> to vector<64x1xf32>
    %182 = tpu.reciprocal %181 {approx = true} : vector<64x1xf32> -> vector<64x1xf32>
    %183 = vector.broadcast %182 : vector<64x1xf32> to vector<64x16xf32>
    %184 = arith.mulf %179, %183 : vector<64x16xf32>
    %cst_77 = arith.constant dense<0.000000e+00> : vector<64x32xf32>
    %185 = tpu.matmul %184, %167, %cst_77 {dimension_numbers = #tpu.dot_dimension_numbers<[1], [0], [0], [1], [0, 0, 1, 1], [], []>} : vector<64x16xf32>, vector<16x32xf32>, vector<64x32xf32> -> vector<64x32xf32>
    %186 = arith.mulf %185, %2 : vector<64x32xf32>
    %cst_78 = arith.constant dense<0.000000e+00> : vector<16x32xf32>
    %187 = tpu.matmul %1, %186, %cst_78 {dimension_numbers = #tpu.dot_dimension_numbers<[1], [0], [0], [1], [0, 0, 1, 1], [], []>} : vector<16x64xf32>, vector<64x32xf32>, vector<16x32xf32> -> vector<16x32xf32>
    %188 = arith.index_cast %c1_i32 : i32 to index
    %c0_79 = arith.constant 0 : index
    %c0_80 = arith.constant 0 : index
    %189 = vector.load %arg10[%188, %c0_79, %c0_80] : memref<2x32x32xf32, #tpu.memory_space<vmem>>, vector<1x32x32xf32>
    %190 = vector.shape_cast %189 : vector<1x32x32xf32> to vector<32x32xf32>
    %cst_81 = arith.constant dense<0.000000e+00> : vector<16x32xf32>
    %191 = tpu.matmul %187, %190, %cst_81 {dimension_numbers = #tpu.dot_dimension_numbers<[1], [0], [0], [1], [0, 0, 1, 1], [], []>} : vector<16x32xf32>, vector<32x32xf32>, vector<16x32xf32> -> vector<16x32xf32>
    %192 = arith.index_cast %c1_i32 : i32 to index
    %c0_82 = arith.constant 0 : index
    %c0_83 = arith.constant 0 : index
    %193 = vector.load %arg11[%192, %c0_82, %c0_83] : memref<2x1x32xf32, #tpu.memory_space<vmem>>, vector<1x1x32xf32>
    %194 = vector.shape_cast %193 : vector<1x1x32xf32> to vector<1x32xf32>
    %195 = vector.broadcast %194 : vector<1x32xf32> to vector<16x32xf32>
    %196 = arith.addf %191, %195 : vector<16x32xf32>
    %197 = arith.addf %196, %155 : vector<16x32xf32>
    %198 = arith.index_cast %c1_i32 : i32 to index
    %c0_84 = arith.constant 0 : index
    %c0_85 = arith.constant 0 : index
    %199 = vector.load %arg12[%198, %c0_84, %c0_85] : memref<2x1x32xf32, #tpu.memory_space<vmem>>, vector<1x1x32xf32>
    %200 = vector.shape_cast %199 : vector<1x1x32xf32> to vector<1x32xf32>
    %201 = arith.index_cast %c1_i32 : i32 to index
    %c0_86 = arith.constant 0 : index
    %c0_87 = arith.constant 0 : index
    %202 = vector.load %arg13[%201, %c0_86, %c0_87] : memref<2x1x32xf32, #tpu.memory_space<vmem>>, vector<1x1x32xf32>
    %203 = vector.shape_cast %202 : vector<1x1x32xf32> to vector<1x32xf32>
    %cst_88 = arith.constant dense<0.000000e+00> : vector<16xf32>
    %204 = vector.multi_reduction <add>, %197, %cst_88 [1] : vector<16x32xf32> to vector<16xf32>
    %205 = vector.shape_cast %204 : vector<16xf32> to vector<16x1xf32>
    %cst_89 = arith.constant 3.200000e+01 : f32
    %206 = vector.broadcast %cst_89 : f32 to vector<16x1xf32>
    %207 = arith.divf %205, %206 : vector<16x1xf32>
    %208 = vector.broadcast %207 : vector<16x1xf32> to vector<16x32xf32>
    %209 = arith.subf %197, %208 : vector<16x32xf32>
    %210 = arith.mulf %209, %209 : vector<16x32xf32>
    %cst_90 = arith.constant dense<0.000000e+00> : vector<16xf32>
    %211 = vector.multi_reduction <add>, %210, %cst_90 [1] : vector<16x32xf32> to vector<16xf32>
    %212 = vector.shape_cast %211 : vector<16xf32> to vector<16x1xf32>
    %cst_91 = arith.constant 3.200000e+01 : f32
    %213 = vector.broadcast %cst_91 : f32 to vector<16x1xf32>
    %214 = arith.divf %212, %213 : vector<16x1xf32>
    %215 = vector.broadcast %207 : vector<16x1xf32> to vector<16x32xf32>
    %216 = arith.subf %197, %215 : vector<16x32xf32>
    %cst_92 = arith.constant 9.99999996E-13 : f32
    %217 = vector.broadcast %cst_92 : f32 to vector<16x1xf32>
    %218 = arith.addf %214, %217 : vector<16x1xf32>
    %219 = math.rsqrt %218 : vector<16x1xf32>
    %220 = vector.broadcast %219 : vector<16x1xf32> to vector<16x32xf32>
    %221 = arith.mulf %216, %220 : vector<16x32xf32>
    %222 = vector.broadcast %200 : vector<1x32xf32> to vector<16x32xf32>
    %223 = arith.mulf %221, %222 : vector<16x32xf32>
    %224 = vector.broadcast %203 : vector<1x32xf32> to vector<16x32xf32>
    %225 = arith.addf %223, %224 : vector<16x32xf32>
    %226 = arith.index_cast %c1_i32 : i32 to index
    %c0_93 = arith.constant 0 : index
    %c0_94 = arith.constant 0 : index
    %227 = vector.load %arg14[%226, %c0_93, %c0_94] : memref<2x32x128xf32, #tpu.memory_space<vmem>>, vector<1x32x128xf32>
    %228 = vector.shape_cast %227 : vector<1x32x128xf32> to vector<32x128xf32>
    %cst_95 = arith.constant dense<0.000000e+00> : vector<16x128xf32>
    %229 = tpu.matmul %225, %228, %cst_95 {dimension_numbers = #tpu.dot_dimension_numbers<[1], [0], [0], [1], [0, 0, 1, 1], [], []>} : vector<16x32xf32>, vector<32x128xf32>, vector<16x128xf32> -> vector<16x128xf32>
    %230 = arith.index_cast %c1_i32 : i32 to index
    %c0_96 = arith.constant 0 : index
    %c0_97 = arith.constant 0 : index
    %231 = vector.load %arg15[%230, %c0_96, %c0_97] : memref<2x1x128xf32, #tpu.memory_space<vmem>>, vector<1x1x128xf32>
    %232 = vector.shape_cast %231 : vector<1x1x128xf32> to vector<1x128xf32>
    %233 = vector.broadcast %232 : vector<1x128xf32> to vector<16x128xf32>
    %234 = arith.addf %229, %233 : vector<16x128xf32>
    %cst_98 = arith.constant 5.000000e-01 : f32
    %235 = vector.broadcast %cst_98 : f32 to vector<16x128xf32>
    %236 = arith.mulf %234, %235 : vector<16x128xf32>
    %cst_99 = arith.constant 1.414210e+00 : f32
    %237 = vector.broadcast %cst_99 : f32 to vector<16x128xf32>
    %238 = arith.divf %234, %237 : vector<16x128xf32>
    %239 = math.erf %238 : vector<16x128xf32>
    %cst_100 = arith.constant 1.000000e+00 : f32
    %240 = vector.broadcast %cst_100 : f32 to vector<16x128xf32>
    %241 = arith.addf %240, %239 : vector<16x128xf32>
    %242 = arith.mulf %236, %241 : vector<16x128xf32>
    %243 = arith.index_cast %c1_i32 : i32 to index
    %c0_101 = arith.constant 0 : index
    %c0_102 = arith.constant 0 : index
    %244 = vector.load %arg16[%243, %c0_101, %c0_102] : memref<2x128x32xf32, #tpu.memory_space<vmem>>, vector<1x128x32xf32>
    %245 = vector.shape_cast %244 : vector<1x128x32xf32> to vector<128x32xf32>
    %cst_103 = arith.constant dense<0.000000e+00> : vector<16x32xf32>
    %246 = tpu.matmul %242, %245, %cst_103 {dimension_numbers = #tpu.dot_dimension_numbers<[1], [0], [0], [1], [0, 0, 1, 1], [], []>} : vector<16x128xf32>, vector<128x32xf32>, vector<16x32xf32> -> vector<16x32xf32>
    %247 = arith.index_cast %c1_i32 : i32 to index
    %c0_104 = arith.constant 0 : index
    %c0_105 = arith.constant 0 : index
    %248 = vector.load %arg17[%247, %c0_104, %c0_105] : memref<2x1x32xf32, #tpu.memory_space<vmem>>, vector<1x1x32xf32>
    %249 = vector.shape_cast %248 : vector<1x1x32xf32> to vector<1x32xf32>
    %250 = vector.broadcast %249 : vector<1x32xf32> to vector<16x32xf32>
    %251 = arith.addf %246, %250 : vector<16x32xf32>
    %252 = arith.addf %251, %225 : vector<16x32xf32>
    %253 = arith.index_cast %c1_i32 : i32 to index
    %c0_106 = arith.constant 0 : index
    %c0_107 = arith.constant 0 : index
    %254 = vector.load %arg18[%253, %c0_106, %c0_107] : memref<2x1x32xf32, #tpu.memory_space<vmem>>, vector<1x1x32xf32>
    %255 = vector.shape_cast %254 : vector<1x1x32xf32> to vector<1x32xf32>
    %256 = arith.index_cast %c1_i32 : i32 to index
    %c0_108 = arith.constant 0 : index
    %c0_109 = arith.constant 0 : index
    %257 = vector.load %arg19[%256, %c0_108, %c0_109] : memref<2x1x32xf32, #tpu.memory_space<vmem>>, vector<1x1x32xf32>
    %258 = vector.shape_cast %257 : vector<1x1x32xf32> to vector<1x32xf32>
    %cst_110 = arith.constant dense<0.000000e+00> : vector<16xf32>
    %259 = vector.multi_reduction <add>, %252, %cst_110 [1] : vector<16x32xf32> to vector<16xf32>
    %260 = vector.shape_cast %259 : vector<16xf32> to vector<16x1xf32>
    %cst_111 = arith.constant 3.200000e+01 : f32
    %261 = vector.broadcast %cst_111 : f32 to vector<16x1xf32>
    %262 = arith.divf %260, %261 : vector<16x1xf32>
    %263 = vector.broadcast %262 : vector<16x1xf32> to vector<16x32xf32>
    %264 = arith.subf %252, %263 : vector<16x32xf32>
    %265 = arith.mulf %264, %264 : vector<16x32xf32>
    %cst_112 = arith.constant dense<0.000000e+00> : vector<16xf32>
    %266 = vector.multi_reduction <add>, %265, %cst_112 [1] : vector<16x32xf32> to vector<16xf32>
    %267 = vector.shape_cast %266 : vector<16xf32> to vector<16x1xf32>
    %cst_113 = arith.constant 3.200000e+01 : f32
    %268 = vector.broadcast %cst_113 : f32 to vector<16x1xf32>
    %269 = arith.divf %267, %268 : vector<16x1xf32>
    %270 = vector.broadcast %262 : vector<16x1xf32> to vector<16x32xf32>
    %271 = arith.subf %252, %270 : vector<16x32xf32>
    %cst_114 = arith.constant 9.99999996E-13 : f32
    %272 = vector.broadcast %cst_114 : f32 to vector<16x1xf32>
    %273 = arith.addf %269, %272 : vector<16x1xf32>
    %274 = math.rsqrt %273 : vector<16x1xf32>
    %275 = vector.broadcast %274 : vector<16x1xf32> to vector<16x32xf32>
    %276 = arith.mulf %271, %275 : vector<16x32xf32>
    %277 = vector.broadcast %255 : vector<1x32xf32> to vector<16x32xf32>
    %278 = arith.mulf %276, %277 : vector<16x32xf32>
    %279 = vector.broadcast %258 : vector<1x32xf32> to vector<16x32xf32>
    %280 = arith.addf %278, %279 : vector<16x32xf32>
    %c2_i32 = arith.constant 2 : i32
    %c0_115 = arith.constant 0 : index
    %c0_116 = arith.constant 0 : index
    %281 = vector.load %arg20[%c0_115, %c0_116] : memref<32x128xf32, #tpu.memory_space<vmem>>, vector<32x128xf32>
    %cst_117 = arith.constant dense<0.000000e+00> : vector<16x128xf32>
    %282 = tpu.matmul %280, %281, %cst_117 {dimension_numbers = #tpu.dot_dimension_numbers<[1], [0], [0], [1], [0, 0, 1, 1], [], []>} : vector<16x32xf32>, vector<32x128xf32>, vector<16x128xf32> -> vector<16x128xf32>
    %c0_118 = arith.constant 0 : index
    %c0_119 = arith.constant 0 : index
    %283 = vector.load %arg21[%c0_118, %c0_119] : memref<1x128xf32, #tpu.memory_space<vmem>>, vector<1x128xf32>
    %284 = vector.broadcast %283 : vector<1x128xf32> to vector<16x128xf32>
    %285 = arith.addf %282, %284 : vector<16x128xf32>
    %286 = vector.shape_cast %285 : vector<16x128xf32> to vector<2x8x128xf32>
    %c0_120 = arith.constant 0 : index
    %c0_121 = arith.constant 0 : index
    %c0_122 = arith.constant 0 : index
    %287 = vector.load %arg22[%c0_120, %c0_121, %c0_122] : memref<2x8x128xf32, #tpu.memory_space<vmem>>, vector<2x8x128xf32>
    tpu.vector_store %arg22[%c0_120, %c0_121, %c0_122], %286 {strides = array<i32>} : memref<2x8x128xf32, #tpu.memory_space<vmem>>, vector<2x8x128xf32>,
    return
  }
  func.func @transform_0(%arg0: i32) -> (i32, i32, i32) {
    %c0_i32 = arith.constant 0 : i32
    %c0_i32_0 = arith.constant 0 : i32
    %c0_i32_1 = arith.constant 0 : i32
    return %arg0, %c0_i32, %c0_i32_0 : i32, i32, i32
  }
  func.func @transform_1(%arg0: i32) -> (i32, i32, i32) {
    %c0_i32 = arith.constant 0 : i32
    %c0_i32_0 = arith.constant 0 : i32
    %c0_i32_1 = arith.constant 0 : i32
    return %arg0, %c0_i32, %c0_i32_0 : i32, i32, i32
  }
  func.func @transform_2(%arg0: i32) -> (i32, i32) {
    %c0_i32 = arith.constant 0 : i32
    %c0_i32_0 = arith.constant 0 : i32
    %c0_i32_1 = arith.constant 0 : i32
    return %c0_i32, %c0_i32_0 : i32, i32
  }
  func.func @transform_3(%arg0: i32) -> (i32, i32) {
    %c0_i32 = arith.constant 0 : i32
    %c0_i32_0 = arith.constant 0 : i32
    %c0_i32_1 = arith.constant 0 : i32
    return %c0_i32, %c0_i32_0 : i32, i32
  }
  func.func @transform_4(%arg0: i32) -> (i32, i32) {
    %c0_i32 = arith.constant 0 : i32
    %c0_i32_0 = arith.constant 0 : i32
    %c0_i32_1 = arith.constant 0 : i32
    return %c0_i32, %c0_i32_0 : i32, i32
  }
  func.func @transform_5(%arg0: i32) -> (i32, i32) {
    %c0_i32 = arith.constant 0 : i32
    %c0_i32_0 = arith.constant 0 : i32
    %c0_i32_1 = arith.constant 0 : i32
    return %c0_i32, %c0_i32_0 : i32, i32
  }
  func.func @transform_6(%arg0: i32) -> (i32, i32) {
    %c0_i32 = arith.constant 0 : i32
    %c0_i32_0 = arith.constant 0 : i32
    %c0_i32_1 = arith.constant 0 : i32
    return %c0_i32, %c0_i32_0 : i32, i32
  }
  func.func @transform_7(%arg0: i32) -> (i32, i32, i32) {
    %c0_i32 = arith.constant 0 : i32
    %c0_i32_0 = arith.constant 0 : i32
    %c0_i32_1 = arith.constant 0 : i32
    %c0_i32_2 = arith.constant 0 : i32
    return %c0_i32, %c0_i32_0, %c0_i32_1 : i32, i32, i32
  }
  func.func @transform_8(%arg0: i32) -> (i32, i32, i32) {
    %c0_i32 = arith.constant 0 : i32
    %c0_i32_0 = arith.constant 0 : i32
    %c0_i32_1 = arith.constant 0 : i32
    %c0_i32_2 = arith.constant 0 : i32
    return %c0_i32, %c0_i32_0, %c0_i32_1 : i32, i32, i32
  }
  func.func @transform_9(%arg0: i32) -> (i32, i32, i32) {
    %c0_i32 = arith.constant 0 : i32
    %c0_i32_0 = arith.constant 0 : i32
    %c0_i32_1 = arith.constant 0 : i32
    %c0_i32_2 = arith.constant 0 : i32
    return %c0_i32, %c0_i32_0, %c0_i32_1 : i32, i32, i32
  }
  func.func @transform_10(%arg0: i32) -> (i32, i32, i32) {
    %c0_i32 = arith.constant 0 : i32
    %c0_i32_0 = arith.constant 0 : i32
    %c0_i32_1 = arith.constant 0 : i32
    %c0_i32_2 = arith.constant 0 : i32
    return %c0_i32, %c0_i32_0, %c0_i32_1 : i32, i32, i32
  }
  func.func @transform_11(%arg0: i32) -> (i32, i32, i32) {
    %c0_i32 = arith.constant 0 : i32
    %c0_i32_0 = arith.constant 0 : i32
    %c0_i32_1 = arith.constant 0 : i32
    %c0_i32_2 = arith.constant 0 : i32
    return %c0_i32, %c0_i32_0, %c0_i32_1 : i32, i32, i32
  }
  func.func @transform_12(%arg0: i32) -> (i32, i32, i32) {
    %c0_i32 = arith.constant 0 : i32
    %c0_i32_0 = arith.constant 0 : i32
    %c0_i32_1 = arith.constant 0 : i32
    %c0_i32_2 = arith.constant 0 : i32
    return %c0_i32, %c0_i32_0, %c0_i32_1 : i32, i32, i32
  }
  func.func @transform_13(%arg0: i32) -> (i32, i32, i32) {
    %c0_i32 = arith.constant 0 : i32
    %c0_i32_0 = arith.constant 0 : i32
    %c0_i32_1 = arith.constant 0 : i32
    %c0_i32_2 = arith.constant 0 : i32
    return %c0_i32, %c0_i32_0, %c0_i32_1 : i32, i32, i32
  }
  func.func @transform_14(%arg0: i32) -> (i32, i32, i32) {
    %c0_i32 = arith.constant 0 : i32
    %c0_i32_0 = arith.constant 0 : i32
    %c0_i32_1 = arith.constant 0 : i32
    %c0_i32_2 = arith.constant 0 : i32
    return %c0_i32, %c0_i32_0, %c0_i32_1 : i32, i32, i32
  }
  func.func @transform_15(%arg0: i32) -> (i32, i32, i32) {
    %c0_i32 = arith.constant 0 : i32
    %c0_i32_0 = arith.constant 0 : i32
    %c0_i32_1 = arith.constant 0 : i32
    %c0_i32_2 = arith.constant 0 : i32
    return %c0_i32, %c0_i32_0, %c0_i32_1 : i32, i32, i32
  }
  func.func @transform_16(%arg0: i32) -> (i32, i32, i32) {
    %c0_i32 = arith.constant 0 : i32
    %c0_i32_0 = arith.constant 0 : i32
    %c0_i32_1 = arith.constant 0 : i32
    %c0_i32_2 = arith.constant 0 : i32
    return %c0_i32, %c0_i32_0, %c0_i32_1 : i32, i32, i32
  }
  func.func @transform_17(%arg0: i32) -> (i32, i32, i32) {
    %c0_i32 = arith.constant 0 : i32
    %c0_i32_0 = arith.constant 0 : i32
    %c0_i32_1 = arith.constant 0 : i32
    %c0_i32_2 = arith.constant 0 : i32
    return %c0_i32, %c0_i32_0, %c0_i32_1 : i32, i32, i32
  }
  func.func @transform_18(%arg0: i32) -> (i32, i32, i32) {
    %c0_i32 = arith.constant 0 : i32
    %c0_i32_0 = arith.constant 0 : i32
    %c0_i32_1 = arith.constant 0 : i32
    %c0_i32_2 = arith.constant 0 : i32
    return %c0_i32, %c0_i32_0, %c0_i32_1 : i32, i32, i32
  }
  func.func @transform_19(%arg0: i32) -> (i32, i32) {
    %c0_i32 = arith.constant 0 : i32
    %c0_i32_0 = arith.constant 0 : i32
    %c0_i32_1 = arith.constant 0 : i32
    return %c0_i32, %c0_i32_0 : i32, i32
  }
  func.func @transform_20(%arg0: i32) -> (i32, i32) {
    %c0_i32 = arith.constant 0 : i32
    %c0_i32_0 = arith.constant 0 : i32
    %c0_i32_1 = arith.constant 0 : i32
    return %c0_i32, %c0_i32_0 : i32, i32
  }
  func.func @transform_21(%arg0: i32) -> (i32, i32, i32) {
    %c0_i32 = arith.constant 0 : i32
    %c0_i32_0 = arith.constant 0 : i32
    %c0_i32_1 = arith.constant 0 : i32
    return %arg0, %c0_i32, %c0_i32_0 : i32, i32, i32
  }
}

</mosaic_0001>

<llo_original>
// kernel: tpu_custom_call.1
$region0: #{tpu_custom_call.1}
  #allocation0 [shape = 'u32[]', space=smem, size = 0x4, offset = 0x4, fixed_abs, tag = 'smem constant byte address 0x4 - core index']
  #allocation1 [shape = 'u32[72,128]{1,0:T(1,128)}', space=vmem, size = 0x9000, scoped, tag = 'internal scratch']
  %s0 = inlined_call_operand.vmem [shape: f32[2,8,32], index: 0, kind: input, shape index: {}]
  %s1 = inlined_call_operand.vmem [shape: f32[1,64,16], index: 1, kind: input, shape index: {}]
  %s2 = inlined_call_operand.vmem [shape: f32[64,16], index: 2, kind: input, shape index: {}]
  %s3 = inlined_call_operand.vmem [shape: f32[16,64], index: 3, kind: input, shape index: {}]
  %s4 = inlined_call_operand.vmem [shape: f32[64,32], index: 4, kind: input, shape index: {}]
  %s5 = inlined_call_operand.vmem [shape: f32[1,32], index: 5, kind: input, shape index: {}]
  %s6 = inlined_call_operand.vmem [shape: f32[1,32], index: 6, kind: input, shape index: {}]
  %s7 = inlined_call_operand.vmem [shape: f32[2,32,96], index: 7, kind: input, shape index: {}]
  %s8 = inlined_call_operand.vmem [shape: f32[2,1,96], index: 8, kind: input, shape index: {}]
  %s9 = inlined_call_operand.vmem [shape: f32[2,32,32], index: 9, kind: input, shape index: {}]
  %s10 = inlined_call_operand.vmem [shape: f32[2,1,32], index: 10, kind: input, shape index: {}]
  %s11 = inlined_call_operand.vmem [shape: f32[2,1,32], index: 11, kind: input, shape index: {}]
  %s12 = inlined_call_operand.vmem [shape: f32[2,1,32], index: 12, kind: input, shape index: {}]
  %s13 = inlined_call_operand.vmem [shape: f32[2,32,128], index: 13, kind: input, shape index: {}]
  %s14 = inlined_call_operand.vmem [shape: f32[2,1,128], index: 14, kind: input, shape index: {}]
  %s15 = inlined_call_operand.vmem [shape: f32[2,128,32], index: 15, kind: input, shape index: {}]
  %s16 = inlined_call_operand.vmem [shape: f32[2,1,32], index: 16, kind: input, shape index: {}]
  %s17 = inlined_call_operand.vmem [shape: f32[2,1,32], index: 17, kind: input, shape index: {}]
  %s18 = inlined_call_operand.vmem [shape: f32[2,1,32], index: 18, kind: input, shape index: {}]
  %s19 = inlined_call_operand.vmem [shape: f32[32,128], index: 19, kind: input, shape index: {}]
  %s20 = inlined_call_operand.vmem [shape: f32[1,128], index: 20, kind: input, shape index: {}]
  %s21 = inlined_call_operand.hbm [shape: f32[2,8,128], index: 21, kind: output, shape index: {}]
  %s22 = sld [smem:[#allocation0]]
  $region94: #{tpu_custom_call.1} parent=0
    _
  %s24 = ssub.s32 1, %s22
  %s25 = scalar_select 0, %s24, %s22
  $region1: #{tpu_custom_call.1} parent=0
    #allocation2 [shape = 'u8[8192]{0}', space=vmem, size = 0x2000, scoped, tag = 'output window, operand 0, single buffered']
    #allocation3 [shape = 's32[1]{0}', space=sflag, size = 0x4, scoped, tag = 'scoped memory for tpu_custom_call.1']
    %26 = vsyncpa [#allocation3], 0
    // Predicated region
    $region2: #{tpu_custom_call.1} parent=1 // pred_check
      _
    $region3: #{tpu_custom_call.1} parent=1 // pred_check_branch
      %28 = sbr.rel (0) target = $region5
    $region4: #{tpu_custom_call.1} parent=1 // pred_region
      _
    $region5: #{tpu_custom_call.1} parent=1 // pred_fallthru
      _
    // Predicated region
    $region6: #{tpu_custom_call.1} parent=1 // pred_check
      _
    $region7: #{tpu_custom_call.1} parent=1 // pred_check_branch
      %30 = sbr.rel (0) target = $region9
    $region8: #{tpu_custom_call.1} parent=1 // pred_region
      _
    $region9: #{tpu_custom_call.1} parent=1 // pred_fallthru
      _
    // Predicated region
    $region10: #{tpu_custom_call.1} parent=1 // pred_check
      _
    $region11: #{tpu_custom_call.1} parent=1 // pred_check_branch
      %32 = sbr.rel (0) target = $region13
    $region12: #{tpu_custom_call.1} parent=1 // pred_region
      _
    $region13: #{tpu_custom_call.1} parent=1 // pred_fallthru
      _
    // Predicated region
    $region14: #{tpu_custom_call.1} parent=1 // pred_check
      _
    $region15: #{tpu_custom_call.1} parent=1 // pred_check_branch
      %34 = sbr.rel (0) target = $region17
    $region16: #{tpu_custom_call.1} parent=1 // pred_region
      _
    $region17: #{tpu_custom_call.1} parent=1 // pred_fallthru
      _
    // Predicated region
    $region18: #{tpu_custom_call.1} parent=1 // pred_check
      _
    $region19: #{tpu_custom_call.1} parent=1 // pred_check_branch
      %36 = sbr.rel (0) target = $region21
    $region20: #{tpu_custom_call.1} parent=1 // pred_region
      _
    $region21: #{tpu_custom_call.1} parent=1 // pred_fallthru
      _
    // Predicated region
    $region22: #{tpu_custom_call.1} parent=1 // pred_check
      _
    $region23: #{tpu_custom_call.1} parent=1 // pred_check_branch
      %38 = sbr.rel (0) target = $region25
    $region24: #{tpu_custom_call.1} parent=1 // pred_region
      _
    $region25: #{tpu_custom_call.1} parent=1 // pred_fallthru
      _
    // Predicated region
    $region26: #{tpu_custom_call.1} parent=1 // pred_check
      _
    $region27: #{tpu_custom_call.1} parent=1 // pred_check_branch
      %40 = sbr.rel (0) target = $region29
    $region28: #{tpu_custom_call.1} parent=1 // pred_region
      _
    $region29: #{tpu_custom_call.1} parent=1 // pred_fallthru
      _
    // Predicated region
    $region30: #{tpu_custom_call.1} parent=1 // pred_check
      _
    $region31: #{tpu_custom_call.1} parent=1 // pred_check_branch
      %42 = sbr.rel (0) target = $region33
    $region32: #{tpu_custom_call.1} parent=1 // pred_region
      _
    $region33: #{tpu_custom_call.1} parent=1 // pred_fallthru
      _
    // Predicated region
    $region34: #{tpu_custom_call.1} parent=1 // pred_check
      _
    $region35: #{tpu_custom_call.1} parent=1 // pred_check_branch
      %44 = sbr.rel (0) target = $region37
    $region36: #{tpu_custom_call.1} parent=1 // pred_region
      _
    $region37: #{tpu_custom_call.1} parent=1 // pred_fallthru
      _
    // Predicated region
    $region38: #{tpu_custom_call.1} parent=1 // pred_check
      _
    $region39: #{tpu_custom_call.1} parent=1 // pred_check_branch
      %46 = sbr.rel (0) target = $region41
    $region40: #{tpu_custom_call.1} parent=1 // pred_region
      _
    $region41: #{tpu_custom_call.1} parent=1 // pred_fallthru
      _
    // Predicated region
    $region42: #{tpu_custom_call.1} parent=1 // pred_check
      _
    $region43: #{tpu_custom_call.1} parent=1 // pred_check_branch
      %48 = sbr.rel (0) target = $region45
    $region44: #{tpu_custom_call.1} parent=1 // pred_region
      _
    $region45: #{tpu_custom_call.1} parent=1 // pred_fallthru
      _
    // Predicated region
    $region46: #{tpu_custom_call.1} parent=1 // pred_check
      _
    $region47: #{tpu_custom_call.1} parent=1 // pred_check_branch
      %50 = sbr.rel (0) target = $region49
    $region48: #{tpu_custom_call.1} parent=1 // pred_region
      _
    $region49: #{tpu_custom_call.1} parent=1 // pred_fallthru
      _
    // Predicated region
    $region50: #{tpu_custom_call.1} parent=1 // pred_check
      _
    $region51: #{tpu_custom_call.1} parent=1 // pred_check_branch
      %52 = sbr.rel (0) target = $region53
    $region52: #{tpu_custom_call.1} parent=1 // pred_region
      _
    $region53: #{tpu_custom_call.1} parent=1 // pred_fallthru
      _
    // Predicated region
    $region54: #{tpu_custom_call.1} parent=1 // pred_check
      _
    $region55: #{tpu_custom_call.1} parent=1 // pred_check_branch
      %54 = sbr.rel (0) target = $region57
    $region56: #{tpu_custom_call.1} parent=1 // pred_region
      _
    $region57: #{tpu_custom_call.1} parent=1 // pred_fallthru
      _
    // Predicated region
    $region58: #{tpu_custom_call.1} parent=1 // pred_check
      _
    $region59: #{tpu_custom_call.1} parent=1 // pred_check_branch
      %56 = sbr.rel (0) target = $region61
    $region60: #{tpu_custom_call.1} parent=1 // pred_region
      _
    $region61: #{tpu_custom_call.1} parent=1 // pred_fallthru
      _
    // Predicated region
    $region62: #{tpu_custom_call.1} parent=1 // pred_check
      _
    $region63: #{tpu_custom_call.1} parent=1 // pred_check_branch
      %58 = sbr.rel (0) target = $region65
    $region64: #{tpu_custom_call.1} parent=1 // pred_region
      _
    $region65: #{tpu_custom_call.1} parent=1 // pred_fallthru
      _
    // Predicated region
    $region66: #{tpu_custom_call.1} parent=1 // pred_check
      _
    $region67: #{tpu_custom_call.1} parent=1 // pred_check_branch
      %60 = sbr.rel (0) target = $region69
    $region68: #{tpu_custom_call.1} parent=1 // pred_region
      _
    $region69: #{tpu_custom_call.1} parent=1 // pred_fallthru
      _
    // Predicated region
    $region70: #{tpu_custom_call.1} parent=1 // pred_check
      _
    $region71: #{tpu_custom_call.1} parent=1 // pred_check_branch
      %62 = sbr.rel (0) target = $region73
    $region72: #{tpu_custom_call.1} parent=1 // pred_region
      _
    $region73: #{tpu_custom_call.1} parent=1 // pred_fallthru
      _
    // Predicated region
    $region74: #{tpu_custom_call.1} parent=1 // pred_check
      _
    $region75: #{tpu_custom_call.1} parent=1 // pred_check_branch
      %64 = sbr.rel (0) target = $region77
    $region76: #{tpu_custom_call.1} parent=1 // pred_region
      _
    $region77: #{tpu_custom_call.1} parent=1 // pred_fallthru
      _
    // Predicated region
    $region78: #{tpu_custom_call.1} parent=1 // pred_check
      _
    $region79: #{tpu_custom_call.1} parent=1 // pred_check_branch
      %66 = sbr.rel (0) target = $region81
    $region80: #{tpu_custom_call.1} parent=1 // pred_region
      _
    $region81: #{tpu_custom_call.1} parent=1 // pred_fallthru
      _
    // Predicated region
    $region82: #{tpu_custom_call.1} parent=1 // pred_check
      _
    $region83: #{tpu_custom_call.1} parent=1 // pred_check_branch
      %68 = sbr.rel (0) target = $region85
    $region84: #{tpu_custom_call.1} parent=1 // pred_region
      _
    $region85: #{tpu_custom_call.1} parent=1 // pred_fallthru
      _
    %v69 = vld [vmem:[%s2] sm:$0xff]
    %v70 = vld [vmem:[%s2 + $0x8] sm:$0xff]
    %v71 = vld [vmem:[%s2 + $0x10] sm:$0xff]
    %v72 = vld [vmem:[%s2 + $0x18] sm:$0xff]
    %v73 = vld [vmem:[%s2 + $0x20] sm:$0xff]
    %v74 = vld [vmem:[%s2 + $0x28] sm:$0xff]
    %v75 = vld [vmem:[%s2 + $0x30] sm:$0xff]
    %v76 = vld [vmem:[%s2 + $0x38] sm:$0xff]
    %v77 = vld [vmem:[%s3] sm:$0xff]
    %v78 = vld [vmem:[%s3 + $0x8] sm:$0xff]
    %v79 = vld [vmem:[%s4] sm:$0xff]
    %v80 = vld [vmem:[%s4 + $0x8] sm:$0xff]
    %v81 = vld [vmem:[%s4 + $0x10] sm:$0xff]
    %v82 = vld [vmem:[%s4 + $0x18] sm:$0xff]
    %v83 = vld [vmem:[%s4 + $0x20] sm:$0xff]
    %v84 = vld [vmem:[%s4 + $0x28] sm:$0xff]
    %v85 = vld [vmem:[%s4 + $0x30] sm:$0xff]
    %v86 = vld [vmem:[%s4 + $0x38] sm:$0xff]
    %v87 = vld [vmem:[%s1] sm:$0xff]
    %v88 = vld [vmem:[%s1 + $0x8] sm:$0xff]
    %v89 = vld [vmem:[%s1 + $0x10] sm:$0xff]
    %v90 = vld [vmem:[%s1 + $0x18] sm:$0xff]
    %v91 = vld [vmem:[%s1 + $0x20] sm:$0xff]
    %v92 = vld [vmem:[%s1 + $0x28] sm:$0xff]
    %v93 = vld [vmem:[%s1 + $0x30] sm:$0xff]
    %v94 = vld [vmem:[%s1 + $0x38] sm:$0xff]
    %v95 = vld [vmem:[%s0] sm:$0xff]
    %v96 = vld [vmem:[%s0 + $0x8] sm:$0xff]
    %v97 = vld [vmem:[%s5] sm:$0x1]
    %v98 = vld [vmem:[%s6] sm:$0x1]
    %vm99 = vcmask 261120
    %v100 = vsel %vm99, %v95, 0.0
    %101 = vadd.xlane.f32.xlu0 %v100
    %v102 = vpop.xlane.xlu0 %101
    %v103 = vsel %vm99, %v96, 0.0
    %104 = vadd.xlane.f32.xlu0 %v103
    %v105 = vpop.xlane.xlu0 %104
    %v106 = vrcp.pop 32.0
    %v107 = vmul.f32 32.0, %v106
    %v108 = vsub.f32 1.0, %v107
    %v109 = vmul.f32 %v106, %v108
    %v110 = vadd.f32 %v106, %v109
    %vm111 = vweird.f32 %v106
    %v112 = vsel %vm111, %v106, %v110
    %v113 = vmul.f32 %v102, %v112
    %v114 = vmul.f32 %v105, %v112
    %v115 = vsub.f32 %v95, %v113
    %v116 = vsub.f32 %v96, %v114
    %v117 = vmul.f32 %v115, %v115
    %v118 = vmul.f32 %v116, %v116
    %v119 = vsel %vm99, %v117, 0.0
    %120 = vadd.xlane.f32.xlu0 %v119
    %v121 = vpop.xlane.xlu0 %120
    %v122 = vsel %vm99, %v118, 0.0
    %123 = vadd.xlane.f32.xlu0 %v122
    %v124 = vpop.xlane.xlu0 %123
    %v125 = vmul.f32 %v121, %v112
    %v126 = vmul.f32 %v124, %v112
    %v127 = vadd.f32 %v125, 1e-12
    %v128 = vadd.f32 %v126, 1e-12
    %v129 = vrsqrt.pop %v127
    %v130 = vmul.f32 %v129, %v127
    %v131 = vmul.f32 %v130, %v129
    %v132 = vmul.f32 0.5, %v131
    %v133 = vsub.f32 1.5, %v132
    %v134 = vmul.f32 %v129, %v133
    %vm135 = vweird.f32 %v127
    %vm136 = vweird.f32 %v129
    %vm137 = vmor %vm135, %vm136
    %v138 = vsel %vm137, %v129, %v134
    %v139 = vrsqrt.pop %v128
    %v140 = vmul.f32 %v139, %v128
    %v141 = vmul.f32 %v140, %v139
    %v142 = vmul.f32 0.5, %v141
    %v143 = vsub.f32 1.5, %v142
    %v144 = vmul.f32 %v139, %v143
    %vm145 = vweird.f32 %v128
    %vm146 = vweird.f32 %v139
    %vm147 = vmor %vm145, %vm146
    %v148 = vsel %vm147, %v139, %v144
    %v149 = vmul.f32 %v115, %v138
    %v150 = vmul.f32 %v116, %v148
    %v152 = vperm.slane %v97, 0
    %v154 = vmul.f32 %v149, %v152
    %v155 = vmul.f32 %v150, %v152
    %v157 = vperm.slane %v98, 0
    %v159 = vadd.f32 %v154, %v157
    %v160 = vadd.f32 %v155, %v157
    %v161 = vld [vmem:[%s7] sm:$0xff]
    %v162 = vld [vmem:[%s7 + $0x8] sm:$0xff]
    %v163 = vld [vmem:[%s7 + $0x10] sm:$0xff]
    %v164 = vld [vmem:[%s7 + $0x18] sm:$0xff]
    %v165 = vld [vmem:[%s8] sm:$0x1]
    %v167 = vperm.slane %v165, 0
    %v170 = vsel %vm99, %v159, 0
    %v173 = vsel %vm99, %v160, 0
    %175 = vmatpush.msra.mxu0 0.0
    %176 = vmatpush.msra.mxu0 0.0
    %177 = vmatpush.msra.mxu0 0.0
    %178 = vmatpush.msra.mxu0 0.0
    %179 = vmatpush.msra.mxu0 0.0
    %180 = vmatpush.msra.mxu0 0.0
    %181 = vmatpush.msra.mxu0 0.0
    %182 = vmatpush.msra.mxu0 0.0
    %183 = vmatpush.msra.mxu0 0.0
    %184 = vmatpush.msra.mxu0 0.0
    %185 = vmatpush.msra.mxu0 0.0
    %186 = vmatpush.msra.mxu0 0.0
    %187 = vmatpush.msra.mxu0 %v164
    %188 = vmatpush.msra.mxu0 %v163
    %189 = vmatpush.msra.mxu0 %v162
    %190 = vmatpush.msra.mxu0 %v161
    %191 = vmatmul.f32.gmra.mxu0 %v170
    %v192 = vpop.f32.mrf.mxu0
    %v193 = vadd.f32 %v167, %v192
    %194 = vmatmul.f32.gmra.mxu0 %v173
    %v195 = vpop.f32.mrf.mxu0
    %v196 = vadd.f32 %v167, %v195
    %197 = vdwg.mxu0
    %vm198 = vcmask 130048
    %v200 = vsel %vm198, %v69, 0
    %v203 = vsel %vm198, %v70, 0
    %v206 = vsel %vm198, %v71, 0
    %v209 = vsel %vm198, %v72, 0
    %v212 = vsel %vm198, %v73, 0
    %v215 = vsel %vm198, %v74, 0
    %v218 = vsel %vm198, %v75, 0
    %v221 = vsel %vm198, %v76, 0
    %223 = vmatpush.msra.mxu0 0.0
    %224 = vmatpush.msra.mxu0 0.0
    %225 = vmatpush.msra.mxu0 0.0
    %226 = vmatpush.msra.mxu0 0.0
    %227 = vmatpush.msra.mxu0 0.0
    %228 = vmatpush.msra.mxu0 0.0
    %229 = vmatpush.msra.mxu0 0.0
    %230 = vmatpush.msra.mxu0 0.0
    %231 = vmatpush.msra.mxu0 0.0
    %232 = vmatpush.msra.mxu0 0.0
    %233 = vmatpush.msra.mxu0 0.0
    %234 = vmatpush.msra.mxu0 0.0
    %235 = vmatpush.msra.mxu0 0.0
    %236 = vmatpush.msra.mxu0 0.0
    %237 = vmatpush.msra.mxu0 %v196
    %238 = vmatpush.msra.mxu0 %v193
    %239 = vmatmul.f32.gmra.mxu0 %v200
    %v240 = vpop.f32.mrf.mxu0
    %v241 = vadd.f32 0.0, %v240
    %242 = vmatmul.f32.gmra.mxu0 %v203
    %v243 = vpop.f32.mrf.mxu0
    %v244 = vadd.f32 0.0, %v243
    %245 = vmatmul.f32.gmra.mxu0 %v206
    %v246 = vpop.f32.mrf.mxu0
    %v247 = vadd.f32 0.0, %v246
    %248 = vmatmul.f32.gmra.mxu0 %v209
    %v249 = vpop.f32.mrf.mxu0
    %v250 = vadd.f32 0.0, %v249
    %251 = vmatmul.f32.gmra.mxu0 %v212
    %v252 = vpop.f32.mrf.mxu0
    %v253 = vadd.f32 0.0, %v252
    %254 = vmatmul.f32.gmra.mxu0 %v215
    %v255 = vpop.f32.mrf.mxu0
    %v256 = vadd.f32 0.0, %v255
    %257 = vmatmul.f32.gmra.mxu0 %v218
    %v258 = vpop.f32.mrf.mxu0
    %v259 = vadd.f32 0.0, %v258
    %260 = vmatmul.f32.gmra.mxu0 %v221
    %v261 = vpop.f32.mrf.mxu0
    %v262 = vadd.f32 0.0, %v261
    %263 = vdwg.mxu0
    %v264 = vmul.f32 %v241, %v79
    %v265 = vmul.f32 %v244, %v80
    %v266 = vmul.f32 %v247, %v81
    %v267 = vmul.f32 %v250, %v82
    %v268 = vmul.f32 %v253, %v83
    %v269 = vmul.f32 %v256, %v84
    %v270 = vmul.f32 %v259, %v85
    %v271 = vmul.f32 %v262, %v86
    %274 = vrot.lane.b32.xlu0 %v193, 96
    %v275 = vpop.permute.xlu0 %274
    %276 = vrot.lane.b32.xlu0 %v196, 96
    %v277 = vpop.permute.xlu0 %276
    %v279 = vsel %vm99, %v264, 0
    %v282 = vsel %vm99, %v265, 0
    %v285 = vsel %vm99, %v266, 0
    %v288 = vsel %vm99, %v267, 0
    %v291 = vsel %vm99, %v268, 0
    %v294 = vsel %vm99, %v269, 0
    %v297 = vsel %vm99, %v270, 0
    %v300 = vsel %vm99, %v271, 0
    %v302 = vsel %vm99, %v275, 0
    %v304 = vsel %vm99, %v277, 0
    %306 = vmatpush.xpose.msra.mxu0 0.0
    %307 = vmatpush.xpose.msra.mxu0 0.0
    %308 = vmatpush.xpose.msra.mxu0 0.0
    %309 = vmatpush.xpose.msra.mxu0 0.0
    %310 = vmatpush.xpose.msra.mxu0 0.0
    %311 = vmatpush.xpose.msra.mxu0 0.0
    %312 = vmatpush.xpose.msra.mxu0 0.0
    %313 = vmatpush.xpose.msra.mxu0 0.0
    %314 = vmatpush.xpose.msra.mxu0 0.0
    %315 = vmatpush.xpose.msra.mxu0 0.0
    %316 = vmatpush.xpose.msra.mxu0 0.0
    %317 = vmatpush.xpose.msra.mxu0 0.0
    %318 = vmatpush.xpose.msra.mxu0 0.0
    %319 = vmatpush.xpose.msra.mxu0 0.0
    %320 = vmatpush.xpose.msra.mxu0 %v304
    %321 = vmatpush.xpose.msra.mxu0 %v302
    %322 = vmatmul.f32.gmra.mxu0 %v279
    %v323 = vpop.f32.mrf.mxu0
    %v324 = vadd.f32 0.0, %v323
    %325 = vmatmul.f32.gmra.mxu0 %v282
    %v326 = vpop.f32.mrf.mxu0
    %v327 = vadd.f32 0.0, %v326
    %328 = vmatmul.f32.gmra.mxu0 %v285
    %v329 = vpop.f32.mrf.mxu0
    %v330 = vadd.f32 0.0, %v329
    %331 = vmatmul.f32.gmra.mxu0 %v288
    %v332 = vpop.f32.mrf.mxu0
    %v333 = vadd.f32 0.0, %v332
    %334 = vmatmul.f32.gmra.mxu0 %v291
    %v335 = vpop.f32.mrf.mxu0
    %v336 = vadd.f32 0.0, %v335
    %337 = vmatmul.f32.gmra.mxu0 %v294
    %v338 = vpop.f32.mrf.mxu0
    %v339 = vadd.f32 0.0, %v338
    %340 = vmatmul.f32.gmra.mxu0 %v297
    %v341 = vpop.f32.mrf.mxu0
    %v342 = vadd.f32 0.0, %v341
    %343 = vmatmul.f32.gmra.mxu0 %v300
    %v344 = vpop.f32.mrf.mxu0
    %v345 = vadd.f32 0.0, %v344
    %346 = vdwg.mxu0
    %v347 = vmul.f32 %v324, 0.35355338
    %v348 = vmul.f32 %v327, 0.35355338
    %v349 = vmul.f32 %v330, 0.35355338
    %v350 = vmul.f32 %v333, 0.35355338
    %v351 = vmul.f32 %v336, 0.35355338
    %v352 = vmul.f32 %v339, 0.35355338
    %v353 = vmul.f32 %v342, 0.35355338
    %v354 = vmul.f32 %v345, 0.35355338
    %v355 = vadd.f32 %v347, %v87
    %v356 = vadd.f32 %v348, %v88
    %v357 = vadd.f32 %v349, %v89
    %v358 = vadd.f32 %v350, %v90
    %v359 = vadd.f32 %v351, %v91
    %v360 = vadd.f32 %v352, %v92
    %v361 = vadd.f32 %v353, %v93
    %v362 = vadd.f32 %v354, %v94
    %v363 = vsel %vm198, %v355, -inf
    %364 = vmax.xlane.f32.xlu0 %v363
    %v365 = vpop.xlane.xlu0 %364
    %v366 = vsel %vm198, %v356, -inf
    %367 = vmax.xlane.f32.xlu0 %v366
    %v368 = vpop.xlane.xlu0 %367
    %v369 = vsel %vm198, %v357, -inf
    %370 = vmax.xlane.f32.xlu0 %v369
    %v371 = vpop.xlane.xlu0 %370
    %v372 = vsel %vm198, %v358, -inf
    %373 = vmax.xlane.f32.xlu0 %v372
    %v374 = vpop.xlane.xlu0 %373
    %v375 = vsel %vm198, %v359, -inf
    %376 = vmax.xlane.f32.xlu0 %v375
    %v377 = vpop.xlane.xlu0 %376
    %v378 = vsel %vm198, %v360, -inf
    %379 = vmax.xlane.f32.xlu0 %v378
    %v380 = vpop.xlane.xlu0 %379
    %v381 = vsel %vm198, %v361, -inf
    %382 = vmax.xlane.f32.xlu0 %v381
    %v383 = vpop.xlane.xlu0 %382
    %v384 = vsel %vm198, %v362, -inf
    %385 = vmax.xlane.f32.xlu0 %v384
    %v386 = vpop.xlane.xlu0 %385
    %v387 = vsub.f32 %v355, %v365
    %v388 = vsub.f32 %v356, %v368
    %v389 = vsub.f32 %v357, %v371
    %v390 = vsub.f32 %v358, %v374
    %v391 = vsub.f32 %v359, %v377
    %v392 = vsub.f32 %v360, %v380
    %v393 = vsub.f32 %v361, %v383
    %v394 = vsub.f32 %v362, %v386
    %v395 = vmul.f32 %v387, 1.442695
    %v396 = vpow.pop %v395
    %v397 = vmul.f32 %v388, 1.442695
    %v398 = vpow.pop %v397
    %v399 = vmul.f32 %v389, 1.442695
    %v400 = vpow.pop %v399
    %v401 = vmul.f32 %v390, 1.442695
    %v402 = vpow.pop %v401
    %v403 = vmul.f32 %v391, 1.442695
    %v404 = vpow.pop %v403
    %v405 = vmul.f32 %v392, 1.442695
    %v406 = vpow.pop %v405
    %v407 = vmul.f32 %v393, 1.442695
    %v408 = vpow.pop %v407
    %v409 = vmul.f32 %v394, 1.442695
    %v410 = vpow.pop %v409
    %v411 = vsel %vm198, %v396, 0.0
    %412 = vadd.xlane.f32.xlu0 %v411
    %v413 = vpop.xlane.xlu0 %412
    %v414 = vsel %vm198, %v398, 0.0
    %415 = vadd.xlane.f32.xlu0 %v414
    %v416 = vpop.xlane.xlu0 %415
    %v417 = vsel %vm198, %v400, 0.0
    %418 = vadd.xlane.f32.xlu0 %v417
    %v419 = vpop.xlane.xlu0 %418
    %v420 = vsel %vm198, %v402, 0.0
    %421 = vadd.xlane.f32.xlu0 %v420
    %v422 = vpop.xlane.xlu0 %421
    %v423 = vsel %vm198, %v404, 0.0
    %424 = vadd.xlane.f32.xlu0 %v423
    %v425 = vpop.xlane.xlu0 %424
    %v426 = vsel %vm198, %v406, 0.0
    %427 = vadd.xlane.f32.xlu0 %v426
    %v428 = vpop.xlane.xlu0 %427
    %v429 = vsel %vm198, %v408, 0.0
    %430 = vadd.xlane.f32.xlu0 %v429
    %v431 = vpop.xlane.xlu0 %430
    %v432 = vsel %vm198, %v410, 0.0
    %433 = vadd.xlane.f32.xlu0 %v432
    %v434 = vpop.xlane.xlu0 %433
    %v435 = vrcp.pop %v413
    %v436 = vrcp.pop %v416
    %v437 = vrcp.pop %v419
    %v438 = vrcp.pop %v422
    %v439 = vrcp.pop %v425
    %v440 = vrcp.pop %v428
    %v441 = vrcp.pop %v431
    %v442 = vrcp.pop %v434
    %v443 = vmul.f32 %v396, %v435
    %v444 = vmul.f32 %v398, %v436
    %v445 = vmul.f32 %v400, %v437
    %v446 = vmul.f32 %v402, %v438
    %v447 = vmul.f32 %v404, %v439
    %v448 = vmul.f32 %v406, %v440
    %v449 = vmul.f32 %v408, %v441
    %v450 = vmul.f32 %v410, %v442
    %451 = vrot.lane.b32.xlu0 %v193, 64
    %v452 = vpop.permute.xlu0 %451
    %453 = vrot.lane.b32.xlu0 %v196, 64
    %v454 = vpop.permute.xlu0 %453
    %v458 = vsel %vm198, %v443, 0
    %v461 = vsel %vm198, %v444, 0
    %v464 = vsel %vm198, %v445, 0
    %v467 = vsel %vm198, %v446, 0
    %v470 = vsel %vm198, %v447, 0
    %v473 = vsel %vm198, %v448, 0
    %v476 = vsel %vm198, %v449, 0
    %v479 = vsel %vm198, %v450, 0
    %481 = vmatpush.msra.mxu0 0.0
    %482 = vmatpush.msra.mxu0 0.0
    %483 = vmatpush.msra.mxu0 0.0
    %484 = vmatpush.msra.mxu0 0.0
    %485 = vmatpush.msra.mxu0 0.0
    %486 = vmatpush.msra.mxu0 0.0
    %487 = vmatpush.msra.mxu0 0.0
    %488 = vmatpush.msra.mxu0 0.0
    %489 = vmatpush.msra.mxu0 0.0
    %490 = vmatpush.msra.mxu0 0.0
    %491 = vmatpush.msra.mxu0 0.0
    %492 = vmatpush.msra.mxu0 0.0
    %493 = vmatpush.msra.mxu0 0.0
    %494 = vmatpush.msra.mxu0 0.0
    %495 = vmatpush.msra.mxu0 %v454
    %496 = vmatpush.msra.mxu0 %v452
    %497 = vmatmul.f32.gmra.mxu0 %v458
    %v498 = vpop.f32.mrf.mxu0
    %v499 = vadd.f32 0.0, %v498
    %500 = vmatmul.f32.gmra.mxu0 %v461
    %v501 = vpop.f32.mrf.mxu0
    %v502 = vadd.f32 0.0, %v501
    %503 = vmatmul.f32.gmra.mxu0 %v464
    %v504 = vpop.f32.mrf.mxu0
    %v505 = vadd.f32 0.0, %v504
    %506 = vmatmul.f32.gmra.mxu0 %v467
    %v507 = vpop.f32.mrf.mxu0
    %v508 = vadd.f32 0.0, %v507
    %509 = vmatmul.f32.gmra.mxu0 %v470
    %v510 = vpop.f32.mrf.mxu0
    %v511 = vadd.f32 0.0, %v510
    %512 = vmatmul.f32.gmra.mxu0 %v473
    %v513 = vpop.f32.mrf.mxu0
    %v514 = vadd.f32 0.0, %v513
    %515 = vmatmul.f32.gmra.mxu0 %v476
    %v516 = vpop.f32.mrf.mxu0
    %v517 = vadd.f32 0.0, %v516
    %518 = vmatmul.f32.gmra.mxu0 %v479
    %v519 = vpop.f32.mrf.mxu0
    %v520 = vadd.f32 0.0, %v519
    %521 = vdwg.mxu0
    %v522 = vmul.f32 %v499, %v79
    %v523 = vmul.f32 %v502, %v80
    %v524 = vmul.f32 %v505, %v81
    %v525 = vmul.f32 %v508, %v82
    %v526 = vmul.f32 %v511, %v83
    %v527 = vmul.f32 %v514, %v84
    %v528 = vmul.f32 %v517, %v85
    %v529 = vmul.f32 %v520, %v86
    %vm530 = vcmask 523264
    %v532 = vsel %vm530, %v77, 0
    %v535 = vsel %vm530, %v78, 0
    %537 = vmatpush.msra.mxu0 0.0
    %538 = vmatpush.msra.mxu0 0.0
    %539 = vmatpush.msra.mxu0 0.0
    %540 = vmatpush.msra.mxu0 0.0
    %541 = vmatpush.msra.mxu0 0.0
    %542 = vmatpush.msra.mxu0 0.0
    %543 = vmatpush.msra.mxu0 0.0
    %544 = vmatpush.msra.mxu0 0.0
    %545 = vmatpush.msra.mxu0 %v529
    %546 = vmatpush.msra.mxu0 %v528
    %547 = vmatpush.msra.mxu0 %v527
    %548 = vmatpush.msra.mxu0 %v526
    %549 = vmatpush.msra.mxu0 %v525
    %550 = vmatpush.msra.mxu0 %v524
    %551 = vmatpush.msra.mxu0 %v523
    %552 = vmatpush.msra.mxu0 %v522
    %553 = vmatmul.f32.gmra.mxu0 %v532
    %v554 = vpop.f32.mrf.mxu0
    %v555 = vadd.f32 0.0, %v554
    %556 = vmatmul.f32.gmra.mxu0 %v535
    %v557 = vpop.f32.mrf.mxu0
    %v558 = vadd.f32 0.0, %v557
    %559 = vdwg.mxu0
    %v560 = vld [vmem:[%s9] sm:$0xff]
    %v561 = vld [vmem:[%s9 + $0x8] sm:$0xff]
    %v562 = vld [vmem:[%s9 + $0x10] sm:$0xff]
    %v563 = vld [vmem:[%s9 + $0x18] sm:$0xff]
    %v564 = vld [vmem:[%s10] sm:$0x1]
    %v566 = vperm.slane %v564, 0
    %v569 = vsel %vm99, %v555, 0
    %v572 = vsel %vm99, %v558, 0
    %574 = vmatpush.msra.mxu0 0.0
    %575 = vmatpush.msra.mxu0 0.0
    %576 = vmatpush.msra.mxu0 0.0
    %577 = vmatpush.msra.mxu0 0.0
    %578 = vmatpush.msra.mxu0 0.0
    %579 = vmatpush.msra.mxu0 0.0
    %580 = vmatpush.msra.mxu0 0.0
    %581 = vmatpush.msra.mxu0 0.0
    %582 = vmatpush.msra.mxu0 0.0
    %583 = vmatpush.msra.mxu0 0.0
    %584 = vmatpush.msra.mxu0 0.0
    %585 = vmatpush.msra.mxu0 0.0
    %586 = vmatpush.msra.mxu0 %v563
    %587 = vmatpush.msra.mxu0 %v562
    %588 = vmatpush.msra.mxu0 %v561
    %589 = vmatpush.msra.mxu0 %v560
    %590 = vmatmul.f32.gmra.mxu0 %v569
    %v591 = vpop.f32.mrf.mxu0
    %v592 = vadd.f32 %v566, %v591
    %593 = vmatmul.f32.gmra.mxu0 %v572
    %v594 = vpop.f32.mrf.mxu0
    %v595 = vadd.f32 %v566, %v594
    %596 = vdwg.mxu0
    %v597 = vadd.f32 %v592, %v159
    %v598 = vadd.f32 %v595, %v160
    %v599 = vld [vmem:[%s11] sm:$0x1]
    %v600 = vld [vmem:[%s12] sm:$0x1]
    %v601 = vsel %vm99, %v597, 0.0
    %602 = vadd.xlane.f32.xlu0 %v601
    %v603 = vpop.xlane.xlu0 %602
    %v604 = vsel %vm99, %v598, 0.0
    %605 = vadd.xlane.f32.xlu0 %v604
    %v606 = vpop.xlane.xlu0 %605
    %v607 = vmul.f32 %v603, %v112
    %v608 = vmul.f32 %v606, %v112
    %v609 = vsub.f32 %v597, %v607
    %v610 = vsub.f32 %v598, %v608
    %v611 = vmul.f32 %v609, %v609
    %v612 = vmul.f32 %v610, %v610
    %v613 = vsel %vm99, %v611, 0.0
    %614 = vadd.xlane.f32.xlu0 %v613
    %v615 = vpop.xlane.xlu0 %614
    %v616 = vsel %vm99, %v612, 0.0
    %617 = vadd.xlane.f32.xlu0 %v616
    %v618 = vpop.xlane.xlu0 %617
    %v619 = vmul.f32 %v615, %v112
    %v620 = vmul.f32 %v618, %v112
    %v621 = vadd.f32 %v619, 1e-12
    %v622 = vadd.f32 %v620, 1e-12
    %v623 = vrsqrt.pop %v621
    %v624 = vmul.f32 %v623, %v621
    %v625 = vmul.f32 %v624, %v623
    %v626 = vmul.f32 0.5, %v625
    %v627 = vsub.f32 1.5, %v626
    %v628 = vmul.f32 %v623, %v627
    %vm629 = vweird.f32 %v621
    %vm630 = vweird.f32 %v623
    %vm631 = vmor %vm629, %vm630
    %v632 = vsel %vm631, %v623, %v628
    %v633 = vrsqrt.pop %v622
    %v634 = vmul.f32 %v633, %v622
    %v635 = vmul.f32 %v634, %v633
    %v636 = vmul.f32 0.5, %v635
    %v637 = vsub.f32 1.5, %v636
    %v638 = vmul.f32 %v633, %v637
    %vm639 = vweird.f32 %v622
    %vm640 = vweird.f32 %v633
    %vm641 = vmor %vm639, %vm640
    %v642 = vsel %vm641, %v633, %v638
    %v643 = vmul.f32 %v609, %v632
    %v644 = vmul.f32 %v610, %v642
    %v646 = vperm.slane %v599, 0
    %v648 = vmul.f32 %v643, %v646
    %v649 = vmul.f32 %v644, %v646
    %v651 = vperm.slane %v600, 0
    %v653 = vadd.f32 %v648, %v651
    %v654 = vadd.f32 %v649, %v651
    %v655 = vld [vmem:[%s13] sm:$0xff]
    %v656 = vld [vmem:[%s13 + $0x8] sm:$0xff]
    %v657 = vld [vmem:[%s13 + $0x10] sm:$0xff]
    %v658 = vld [vmem:[%s13 + $0x18] sm:$0xff]
    %v659 = vld [vmem:[%s14] sm:$0x1]
    %v661 = vperm.slane %v659, 0
    %v664 = vsel %vm99, %v653, 0
    %v667 = vsel %vm99, %v654, 0
    %669 = vmatpush.msra.mxu0 0.0
    %670 = vmatpush.msra.mxu0 0.0
    %671 = vmatpush.msra.mxu0 0.0
    %672 = vmatpush.msra.mxu0 0.0
    %673 = vmatpush.msra.mxu0 0.0
    %674 = vmatpush.msra.mxu0 0.0
    %675 = vmatpush.msra.mxu0 0.0
    %676 = vmatpush.msra.mxu0 0.0
    %677 = vmatpush.msra.mxu0 0.0
    %678 = vmatpush.msra.mxu0 0.0
    %679 = vmatpush.msra.mxu0 0.0
    %680 = vmatpush.msra.mxu0 0.0
    %681 = vmatpush.msra.mxu0 %v658
    %682 = vmatpush.msra.mxu0 %v657
    %683 = vmatpush.msra.mxu0 %v656
    %684 = vmatpush.msra.mxu0 %v655
    %685 = vmatmul.f32.gmra.mxu0 %v664
    %v686 = vpop.f32.mrf.mxu0
    %v687 = vadd.f32 %v661, %v686
    %688 = vmatmul.f32.gmra.mxu0 %v667
    %v689 = vpop.f32.mrf.mxu0
    %v690 = vadd.f32 %v661, %v689
    %691 = vdwg.mxu0
    %v692 = vmul.f32 %v687, 0.5
    %v693 = vmul.f32 %v690, 0.5
    %v694 = vrcp.pop 1.41421
    %v695 = vmul.f32 1.41421, %v694
    %v696 = vsub.f32 1.0, %v695
    %v697 = vmul.f32 %v694, %v696
    %v698 = vadd.f32 %v694, %v697
    %vm699 = vweird.f32 %v694
    %v700 = vsel %vm699, %v694, %v698
    %v701 = vmul.f32 %v687, %v700
    %v702 = vmul.f32 %v690, %v700
    %v703 = vmul.f32 %v701, %v701
    %v704 = vmin.f32 16.0, %v703
    %v705 = vmul.f32 %v704, 2.1237322e-06
    %v706 = vadd.f32 %v705, 0.00028619796
    %v707 = vmul.f32 %v704, %v706
    %v708 = vadd.f32 %v707, 0.0036580483
    %v709 = vmul.f32 %v704, %v708
    %v710 = vadd.f32 %v709, 0.05243302
    %v711 = vmul.f32 %v704, %v710
    %v712 = vadd.f32 %v711, 0.18741608
    %v713 = vmul.f32 %v704, %v712
    %v714 = vadd.f32 %v713, 1.1283791
    %v715 = vmul.f32 %v701, %v714
    %v716 = vmul.f32 %v704, 3.8918573e-05
    %v717 = vadd.f32 %v716, 0.001143296
    %v718 = vmul.f32 %v704, %v717
    %v719 = vadd.f32 %v718, 0.014752088
    %v720 = vmul.f32 %v704, %v719
    %v721 = vadd.f32 %v720, 0.112945676
    %v722 = vmul.f32 %v704, %v721
    %v723 = vadd.f32 %v722, 0.4994258
    %v724 = vmul.f32 %v704, %v723
    %v725 = vadd.f32 %v724, 1.0
    %v726 = vrcp.pop %v725
    %v727 = vmul.f32 %v725, %v726
    %v728 = vsub.f32 1.0, %v727
    %v729 = vmul.f32 %v726, %v728
    %v730 = vadd.f32 %v726, %v729
    %vm731 = vweird.f32 %v725
    %vm732 = vweird.f32 %v726
    %vm733 = vmor %vm731, %vm732
    %v734 = vsel %vm733, %v726, %v730
    %v735 = vand.u32 2147483647, %v725
    %vm736 = vcmp.eq.f32.partialorder %v735, 8.507059e+37
    %v737 = vand.u32 %v725, 2147483648
    %v738 = vor.u32 1.1754944e-38, %v737
    %v739 = vsel %vm736, %v738, %v734
    %v740 = vmul.f32 %v715, %v739
    %v741 = vmin.f32 %v740, 1.0
    %v742 = vmax.f32 %v741, -1.0
    %v743 = vmul.f32 %v702, %v702
    %v744 = vmin.f32 16.0, %v743
    %v745 = vmul.f32 %v744, 2.1237322e-06
    %v746 = vadd.f32 %v745, 0.00028619796
    %v747 = vmul.f32 %v744, %v746
    %v748 = vadd.f32 %v747, 0.0036580483
    %v749 = vmul.f32 %v744, %v748
    %v750 = vadd.f32 %v749, 0.05243302
    %v751 = vmul.f32 %v744, %v750
    %v752 = vadd.f32 %v751, 0.18741608
    %v753 = vmul.f32 %v744, %v752
    %v754 = vadd.f32 %v753, 1.1283791
    %v755 = vmul.f32 %v702, %v754
    %v756 = vmul.f32 %v744, 3.8918573e-05
    %v757 = vadd.f32 %v756, 0.001143296
    %v758 = vmul.f32 %v744, %v757
    %v759 = vadd.f32 %v758, 0.014752088
    %v760 = vmul.f32 %v744, %v759
    %v761 = vadd.f32 %v760, 0.112945676
    %v762 = vmul.f32 %v744, %v761
    %v763 = vadd.f32 %v762, 0.4994258
    %v764 = vmul.f32 %v744, %v763
    %v765 = vadd.f32 %v764, 1.0
    %v766 = vrcp.pop %v765
    %v767 = vmul.f32 %v765, %v766
    %v768 = vsub.f32 1.0, %v767
    %v769 = vmul.f32 %v766, %v768
    %v770 = vadd.f32 %v766, %v769
    %vm771 = vweird.f32 %v765
    %vm772 = vweird.f32 %v766
    %vm773 = vmor %vm771, %vm772
    %v774 = vsel %vm773, %v766, %v770
    %v775 = vand.u32 2147483647, %v765
    %vm776 = vcmp.eq.f32.partialorder %v775, 8.507059e+37
    %v777 = vand.u32 %v765, 2147483648
    %v778 = vor.u32 1.1754944e-38, %v777
    %v779 = vsel %vm776, %v778, %v774
    %v780 = vmul.f32 %v755, %v779
    %v781 = vmin.f32 %v780, 1.0
    %v782 = vmax.f32 %v781, -1.0
    %v783 = vadd.f32 %v742, 1.0
    %v784 = vadd.f32 %v782, 1.0
    %v785 = vmul.f32 %v692, %v783
    %v786 = vmul.f32 %v693, %v784
    %v787 = vld [vmem:[%s15] sm:$0xff]
    %v788 = vld [vmem:[%s15 + $0x8] sm:$0xff]
    %v789 = vld [vmem:[%s15 + $0x10] sm:$0xff]
    %v790 = vld [vmem:[%s15 + $0x18] sm:$0xff]
    %v791 = vld [vmem:[%s15 + $0x20] sm:$0xff]
    %v792 = vld [vmem:[%s15 + $0x28] sm:$0xff]
    %v793 = vld [vmem:[%s15 + $0x30] sm:$0xff]
    %v794 = vld [vmem:[%s15 + $0x38] sm:$0xff]
    %v795 = vld [vmem:[%s15 + $0x40] sm:$0xff]
    %v796 = vld [vmem:[%s15 + $0x48] sm:$0xff]
    %v797 = vld [vmem:[%s15 + $0x50] sm:$0xff]
    %v798 = vld [vmem:[%s15 + $0x58] sm:$0xff]
    %v799 = vld [vmem:[%s15 + $0x60] sm:$0xff]
    %v800 = vld [vmem:[%s15 + $0x68] sm:$0xff]
    %v801 = vld [vmem:[%s15 + $0x70] sm:$0xff]
    %v802 = vld [vmem:[%s15 + $0x78] sm:$0xff]
    %v803 = vld [vmem:[%s16] sm:$0x1]
    %v805 = vperm.slane %v803, 0
    %807 = vmatpush.msra.mxu0 %v802
    %808 = vmatpush.msra.mxu0 %v801
    %809 = vmatpush.msra.mxu0 %v800
    %810 = vmatpush.msra.mxu0 %v799
    %811 = vmatpush.msra.mxu0 %v798
    %812 = vmatpush.msra.mxu0 %v797
    %813 = vmatpush.msra.mxu0 %v796
    %814 = vmatpush.msra.mxu0 %v795
    %815 = vmatpush.msra.mxu0 %v794
    %816 = vmatpush.msra.mxu0 %v793
    %817 = vmatpush.msra.mxu0 %v792
    %818 = vmatpush.msra.mxu0 %v791
    %819 = vmatpush.msra.mxu0 %v790
    %820 = vmatpush.msra.mxu0 %v789
    %821 = vmatpush.msra.mxu0 %v788
    %822 = vmatpush.msra.mxu0 %v787
    %823 = vmatmul.f32.gmra.mxu0 %v785
    %v824 = vpop.f32.mrf.mxu0
    %v825 = vadd.f32 %v805, %v824
    %826 = vmatmul.f32.gmra.mxu0 %v786
    %v827 = vpop.f32.mrf.mxu0
    %v828 = vadd.f32 %v805, %v827
    %829 = vdwg.mxu0
    %v830 = vadd.f32 %v825, %v653
    %v831 = vadd.f32 %v828, %v654
    %v832 = vld [vmem:[%s17] sm:$0x1]
    %v833 = vld [vmem:[%s18] sm:$0x1]
    %v834 = vsel %vm99, %v830, 0.0
    %835 = vadd.xlane.f32.xlu0 %v834
    %v836 = vpop.xlane.xlu0 %835
    %v837 = vsel %vm99, %v831, 0.0
    %838 = vadd.xlane.f32.xlu0 %v837
    %v839 = vpop.xlane.xlu0 %838
    %v840 = vmul.f32 %v836, %v112
    %v841 = vmul.f32 %v839, %v112
    %v842 = vsub.f32 %v830, %v840
    %v843 = vsub.f32 %v831, %v841
    %v844 = vmul.f32 %v842, %v842
    %v845 = vmul.f32 %v843, %v843
    %v846 = vsel %vm99, %v844, 0.0
    %847 = vadd.xlane.f32.xlu0 %v846
    %v848 = vpop.xlane.xlu0 %847
    %v849 = vsel %vm99, %v845, 0.0
    %850 = vadd.xlane.f32.xlu0 %v849
    %v851 = vpop.xlane.xlu0 %850
    %v852 = vmul.f32 %v848, %v112
    %v853 = vmul.f32 %v851, %v112
    %v854 = vadd.f32 %v852, 1e-12
    %v855 = vadd.f32 %v853, 1e-12
    %v856 = vrsqrt.pop %v854
    %v857 = vmul.f32 %v856, %v854
    %v858 = vmul.f32 %v857, %v856
    %v859 = vmul.f32 0.5, %v858
    %v860 = vsub.f32 1.5, %v859
    %v861 = vmul.f32 %v856, %v860
    %vm862 = vweird.f32 %v854
    %vm863 = vweird.f32 %v856
    %vm864 = vmor %vm862, %vm863
    %v865 = vsel %vm864, %v856, %v861
    %v866 = vrsqrt.pop %v855
    %v867 = vmul.f32 %v866, %v855
    %v868 = vmul.f32 %v867, %v866
    %v869 = vmul.f32 0.5, %v868
    %v870 = vsub.f32 1.5, %v869
    %v871 = vmul.f32 %v866, %v870
    %vm872 = vweird.f32 %v855
    %vm873 = vweird.f32 %v866
    %vm874 = vmor %vm872, %vm873
    %v875 = vsel %vm874, %v866, %v871
    %v876 = vmul.f32 %v842, %v865
    %v877 = vmul.f32 %v843, %v875
    %v879 = vperm.slane %v832, 0
    %v881 = vmul.f32 %v876, %v879
    %v882 = vmul.f32 %v877, %v879
    %v884 = vperm.slane %v833, 0
    %v886 = vadd.f32 %v881, %v884
    %v887 = vadd.f32 %v882, %v884
    %s888 = scalar_lea.vmem %s7, 32
    %v889 = vld [vmem:[%s888] sm:$0xff]
    %v890 = vld [vmem:[%s888 + $0x8] sm:$0xff]
    %v891 = vld [vmem:[%s888 + $0x10] sm:$0xff]
    %v892 = vld [vmem:[%s888 + $0x18] sm:$0xff]
    %s893 = scalar_lea.vmem %s8, 1
    %v894 = vld [vmem:[%s893] sm:$0x1]
    %v896 = vperm.slane %v894, 0
    %v899 = vsel %vm99, %v886, 0
    %v902 = vsel %vm99, %v887, 0
    %904 = vmatpush.msra.mxu0 0.0
    %905 = vmatpush.msra.mxu0 0.0
    %906 = vmatpush.msra.mxu0 0.0
    %907 = vmatpush.msra.mxu0 0.0
    %908 = vmatpush.msra.mxu0 0.0
    %909 = vmatpush.msra.mxu0 0.0
    %910 = vmatpush.msra.mxu0 0.0
    %911 = vmatpush.msra.mxu0 0.0
    %912 = vmatpush.msra.mxu0 0.0
    %913 = vmatpush.msra.mxu0 0.0
    %914 = vmatpush.msra.mxu0 0.0
    %915 = vmatpush.msra.mxu0 0.0
    %916 = vmatpush.msra.mxu0 %v892
    %917 = vmatpush.msra.mxu0 %v891
    %918 = vmatpush.msra.mxu0 %v890
    %919 = vmatpush.msra.mxu0 %v889
    %920 = vmatmul.f32.gmra.mxu0 %v899
    %v921 = vpop.f32.mrf.mxu0
    %v922 = vadd.f32 %v896, %v921
    %923 = vmatmul.f32.gmra.mxu0 %v902
    %v924 = vpop.f32.mrf.mxu0
    %v925 = vadd.f32 %v896, %v924
    %926 = vdwg.mxu0
    %927 = vmatpush.msra.mxu0 0.0
    %928 = vmatpush.msra.mxu0 0.0
    %929 = vmatpush.msra.mxu0 0.0
    %930 = vmatpush.msra.mxu0 0.0
    %931 = vmatpush.msra.mxu0 0.0
    %932 = vmatpush.msra.mxu0 0.0
    %933 = vmatpush.msra.mxu0 0.0
    %934 = vmatpush.msra.mxu0 0.0
    %935 = vmatpush.msra.mxu0 0.0
    %936 = vmatpush.msra.mxu0 0.0
    %937 = vmatpush.msra.mxu0 0.0
    %938 = vmatpush.msra.mxu0 0.0
    %939 = vmatpush.msra.mxu0 0.0
    %940 = vmatpush.msra.mxu0 0.0
    %941 = vmatpush.msra.mxu0 %v925
    %942 = vmatpush.msra.mxu0 %v922
    %943 = vmatmul.f32.gmra.mxu0 %v200
    %v944 = vpop.f32.mrf.mxu0
    %v945 = vadd.f32 0.0, %v944
    %946 = vmatmul.f32.gmra.mxu0 %v203
    %v947 = vpop.f32.mrf.mxu0
    %v948 = vadd.f32 0.0, %v947
    %949 = vmatmul.f32.gmra.mxu0 %v206
    %v950 = vpop.f32.mrf.mxu0
    %v951 = vadd.f32 0.0, %v950
    %952 = vmatmul.f32.gmra.mxu0 %v209
    %v953 = vpop.f32.mrf.mxu0
    %v954 = vadd.f32 0.0, %v953
    %955 = vmatmul.f32.gmra.mxu0 %v212
    %v956 = vpop.f32.mrf.mxu0
    %v957 = vadd.f32 0.0, %v956
    %958 = vmatmul.f32.gmra.mxu0 %v215
    %v959 = vpop.f32.mrf.mxu0
    %v960 = vadd.f32 0.0, %v959
    %961 = vmatmul.f32.gmra.mxu0 %v218
    %v962 = vpop.f32.mrf.mxu0
    %v963 = vadd.f32 0.0, %v962
    %964 = vmatmul.f32.gmra.mxu0 %v221
    %v965 = vpop.f32.mrf.mxu0
    %v966 = vadd.f32 0.0, %v965
    %967 = vdwg.mxu0
    %v968 = vmul.f32 %v945, %v79
    %v969 = vmul.f32 %v948, %v80
    %v970 = vmul.f32 %v951, %v81
    %v971 = vmul.f32 %v954, %v82
    %v972 = vmul.f32 %v957, %v83
    %v973 = vmul.f32 %v960, %v84
    %v974 = vmul.f32 %v963, %v85
    %v975 = vmul.f32 %v966, %v86
    %978 = vrot.lane.b32.xlu0 %v922, 96
    %v979 = vpop.permute.xlu0 %978
    %980 = vrot.lane.b32.xlu0 %v925, 96
    %v981 = vpop.permute.xlu0 %980
    %v983 = vsel %vm99, %v968, 0
    %v986 = vsel %vm99, %v969, 0
    %v989 = vsel %vm99, %v970, 0
    %v992 = vsel %vm99, %v971, 0
    %v995 = vsel %vm99, %v972, 0
    %v998 = vsel %vm99, %v973, 0
    %v1001 = vsel %vm99, %v974, 0
    %v1004 = vsel %vm99, %v975, 0
    %v1006 = vsel %vm99, %v979, 0
    %v1008 = vsel %vm99, %v981, 0
    %1010 = vmatpush.xpose.msra.mxu0 0.0
    %1011 = vmatpush.xpose.msra.mxu0 0.0
    %1012 = vmatpush.xpose.msra.mxu0 0.0
    %1013 = vmatpush.xpose.msra.mxu0 0.0
    %1014 = vmatpush.xpose.msra.mxu0 0.0
    %1015 = vmatpush.xpose.msra.mxu0 0.0
    %1016 = vmatpush.xpose.msra.mxu0 0.0
    %1017 = vmatpush.xpose.msra.mxu0 0.0
    %1018 = vmatpush.xpose.msra.mxu0 0.0
    %1019 = vmatpush.xpose.msra.mxu0 0.0
    %1020 = vmatpush.xpose.msra.mxu0 0.0
    %1021 = vmatpush.xpose.msra.mxu0 0.0
    %1022 = vmatpush.xpose.msra.mxu0 0.0
    %1023 = vmatpush.xpose.msra.mxu0 0.0
    %1024 = vmatpush.xpose.msra.mxu0 %v1008
    %1025 = vmatpush.xpose.msra.mxu0 %v1006
    %1026 = vmatmul.f32.gmra.mxu0 %v983
    %v1027 = vpop.f32.mrf.mxu0
    %v1028 = vadd.f32 0.0, %v1027
    %1029 = vmatmul.f32.gmra.mxu0 %v986
    %v1030 = vpop.f32.mrf.mxu0
    %v1031 = vadd.f32 0.0, %v1030
    %1032 = vmatmul.f32.gmra.mxu0 %v989
    %v1033 = vpop.f32.mrf.mxu0
    %v1034 = vadd.f32 0.0, %v1033
    %1035 = vmatmul.f32.gmra.mxu0 %v992
    %v1036 = vpop.f32.mrf.mxu0
    %v1037 = vadd.f32 0.0, %v1036
    %1038 = vmatmul.f32.gmra.mxu0 %v995
    %v1039 = vpop.f32.mrf.mxu0
    %v1040 = vadd.f32 0.0, %v1039
    %1041 = vmatmul.f32.gmra.mxu0 %v998
    %v1042 = vpop.f32.mrf.mxu0
    %v1043 = vadd.f32 0.0, %v1042
    %1044 = vmatmul.f32.gmra.mxu0 %v1001
    %v1045 = vpop.f32.mrf.mxu0
    %v1046 = vadd.f32 0.0, %v1045
    %1047 = vmatmul.f32.gmra.mxu0 %v1004
    %v1048 = vpop.f32.mrf.mxu0
    %v1049 = vadd.f32 0.0, %v1048
    %1050 = vdwg.mxu0
    %v1051 = vmul.f32 %v1028, 0.35355338
    %v1052 = vmul.f32 %v1031, 0.35355338
    %v1053 = vmul.f32 %v1034, 0.35355338
    %v1054 = vmul.f32 %v1037, 0.35355338
    %v1055 = vmul.f32 %v1040, 0.35355338
    %v1056 = vmul.f32 %v1043, 0.35355338
    %v1057 = vmul.f32 %v1046, 0.35355338
    %v1058 = vmul.f32 %v1049, 0.35355338
    %v1059 = vadd.f32 %v1051, %v87
    %v1060 = vadd.f32 %v1052, %v88
    %v1061 = vadd.f32 %v1053, %v89
    %v1062 = vadd.f32 %v1054, %v90
    %v1063 = vadd.f32 %v1055, %v91
    %v1064 = vadd.f32 %v1056, %v92
    %v1065 = vadd.f32 %v1057, %v93
    %v1066 = vadd.f32 %v1058, %v94
    %v1067 = vsel %vm198, %v1059, -inf
    %1068 = vmax.xlane.f32.xlu0 %v1067
    %v1069 = vpop.xlane.xlu0 %1068
    %v1070 = vsel %vm198, %v1060, -inf
    %1071 = vmax.xlane.f32.xlu0 %v1070
    %v1072 = vpop.xlane.xlu0 %1071
    %v1073 = vsel %vm198, %v1061, -inf
    %1074 = vmax.xlane.f32.xlu0 %v1073
    %v1075 = vpop.xlane.xlu0 %1074
    %v1076 = vsel %vm198, %v1062, -inf
    %1077 = vmax.xlane.f32.xlu0 %v1076
    %v1078 = vpop.xlane.xlu0 %1077
    %v1079 = vsel %vm198, %v1063, -inf
    %1080 = vmax.xlane.f32.xlu0 %v1079
    %v1081 = vpop.xlane.xlu0 %1080
    %v1082 = vsel %vm198, %v1064, -inf
    %1083 = vmax.xlane.f32.xlu0 %v1082
    %v1084 = vpop.xlane.xlu0 %1083
    %v1085 = vsel %vm198, %v1065, -inf
    %1086 = vmax.xlane.f32.xlu0 %v1085
    %v1087 = vpop.xlane.xlu0 %1086
    %v1088 = vsel %vm198, %v1066, -inf
    %1089 = vmax.xlane.f32.xlu0 %v1088
    %v1090 = vpop.xlane.xlu0 %1089
    %v1091 = vsub.f32 %v1059, %v1069
    %v1092 = vsub.f32 %v1060, %v1072
    %v1093 = vsub.f32 %v1061, %v1075
    %v1094 = vsub.f32 %v1062, %v1078
    %v1095 = vsub.f32 %v1063, %v1081
    %v1096 = vsub.f32 %v1064, %v1084
    %v1097 = vsub.f32 %v1065, %v1087
    %v1098 = vsub.f32 %v1066, %v1090
    %v1099 = vmul.f32 %v1091, 1.442695
    %v1100 = vpow.pop %v1099
    %v1101 = vmul.f32 %v1092, 1.442695
    %v1102 = vpow.pop %v1101
    %v1103 = vmul.f32 %v1093, 1.442695
    %v1104 = vpow.pop %v1103
    %v1105 = vmul.f32 %v1094, 1.442695
    %v1106 = vpow.pop %v1105
    %v1107 = vmul.f32 %v1095, 1.442695
    %v1108 = vpow.pop %v1107
    %v1109 = vmul.f32 %v1096, 1.442695
    %v1110 = vpow.pop %v1109
    %v1111 = vmul.f32 %v1097, 1.442695
    %v1112 = vpow.pop %v1111
    %v1113 = vmul.f32 %v1098, 1.442695
    %v1114 = vpow.pop %v1113
    %v1115 = vsel %vm198, %v1100, 0.0
    %1116 = vadd.xlane.f32.xlu0 %v1115
    %v1117 = vpop.xlane.xlu0 %1116
    %v1118 = vsel %vm198, %v1102, 0.0
    %1119 = vadd.xlane.f32.xlu0 %v1118
    %v1120 = vpop.xlane.xlu0 %1119
    %v1121 = vsel %vm198, %v1104, 0.0
    %1122 = vadd.xlane.f32.xlu0 %v1121
    %v1123 = vpop.xlane.xlu0 %1122
    %v1124 = vsel %vm198, %v1106, 0.0
    %1125 = vadd.xlane.f32.xlu0 %v1124
    %v1126 = vpop.xlane.xlu0 %1125
    %v1127 = vsel %vm198, %v1108, 0.0
    %1128 = vadd.xlane.f32.xlu0 %v1127
    %v1129 = vpop.xlane.xlu0 %1128
    %v1130 = vsel %vm198, %v1110, 0.0
    %1131 = vadd.xlane.f32.xlu0 %v1130
    %v1132 = vpop.xlane.xlu0 %1131
    %v1133 = vsel %vm198, %v1112, 0.0
    %1134 = vadd.xlane.f32.xlu0 %v1133
    %v1135 = vpop.xlane.xlu0 %1134
    %v1136 = vsel %vm198, %v1114, 0.0
    %1137 = vadd.xlane.f32.xlu0 %v1136
    %v1138 = vpop.xlane.xlu0 %1137
    %v1139 = vrcp.pop %v1117
    %v1140 = vrcp.pop %v1120
    %v1141 = vrcp.pop %v1123
    %v1142 = vrcp.pop %v1126
    %v1143 = vrcp.pop %v1129
    %v1144 = vrcp.pop %v1132
    %v1145 = vrcp.pop %v1135
    %v1146 = vrcp.pop %v1138
    %v1147 = vmul.f32 %v1100, %v1139
    %v1148 = vmul.f32 %v1102, %v1140
    %v1149 = vmul.f32 %v1104, %v1141
    %v1150 = vmul.f32 %v1106, %v1142
    %v1151 = vmul.f32 %v1108, %v1143
    %v1152 = vmul.f32 %v1110, %v1144
    %v1153 = vmul.f32 %v1112, %v1145
    %v1154 = vmul.f32 %v1114, %v1146
    %1155 = vrot.lane.b32.xlu0 %v922, 64
    %v1156 = vpop.permute.xlu0 %1155
    %1157 = vrot.lane.b32.xlu0 %v925, 64
    %v1158 = vpop.permute.xlu0 %1157
    %v1162 = vsel %vm198, %v1147, 0
    %v1165 = vsel %vm198, %v1148, 0
    %v1168 = vsel %vm198, %v1149, 0
    %v1171 = vsel %vm198, %v1150, 0
    %v1174 = vsel %vm198, %v1151, 0
    %v1177 = vsel %vm198, %v1152, 0
    %v1180 = vsel %vm198, %v1153, 0
    %v1183 = vsel %vm198, %v1154, 0
    %1185 = vmatpush.msra.mxu0 0.0
    %1186 = vmatpush.msra.mxu0 0.0
    %1187 = vmatpush.msra.mxu0 0.0
    %1188 = vmatpush.msra.mxu0 0.0
    %1189 = vmatpush.msra.mxu0 0.0
    %1190 = vmatpush.msra.mxu0 0.0
    %1191 = vmatpush.msra.mxu0 0.0
    %1192 = vmatpush.msra.mxu0 0.0
    %1193 = vmatpush.msra.mxu0 0.0
    %1194 = vmatpush.msra.mxu0 0.0
    %1195 = vmatpush.msra.mxu0 0.0
    %1196 = vmatpush.msra.mxu0 0.0
    %1197 = vmatpush.msra.mxu0 0.0
    %1198 = vmatpush.msra.mxu0 0.0
    %1199 = vmatpush.msra.mxu0 %v1158
    %1200 = vmatpush.msra.mxu0 %v1156
    %1201 = vmatmul.f32.gmra.mxu0 %v1162
    %v1202 = vpop.f32.mrf.mxu0
    %v1203 = vadd.f32 0.0, %v1202
    %1204 = vmatmul.f32.gmra.mxu0 %v1165
    %v1205 = vpop.f32.mrf.mxu0
    %v1206 = vadd.f32 0.0, %v1205
    %1207 = vmatmul.f32.gmra.mxu0 %v1168
    %v1208 = vpop.f32.mrf.mxu0
    %v1209 = vadd.f32 0.0, %v1208
    %1210 = vmatmul.f32.gmra.mxu0 %v1171
    %v1211 = vpop.f32.mrf.mxu0
    %v1212 = vadd.f32 0.0, %v1211
    %1213 = vmatmul.f32.gmra.mxu0 %v1174
    %v1214 = vpop.f32.mrf.mxu0
    %v1215 = vadd.f32 0.0, %v1214
    %1216 = vmatmul.f32.gmra.mxu0 %v1177
    %v1217 = vpop.f32.mrf.mxu0
    %v1218 = vadd.f32 0.0, %v1217
    %1219 = vmatmul.f32.gmra.mxu0 %v1180
    %v1220 = vpop.f32.mrf.mxu0
    %v1221 = vadd.f32 0.0, %v1220
    %1222 = vmatmul.f32.gmra.mxu0 %v1183
    %v1223 = vpop.f32.mrf.mxu0
    %v1224 = vadd.f32 0.0, %v1223
    %1225 = vdwg.mxu0
    %v1226 = vmul.f32 %v1203, %v79
    %v1227 = vmul.f32 %v1206, %v80
    %v1228 = vmul.f32 %v1209, %v81
    %v1229 = vmul.f32 %v1212, %v82
    %v1230 = vmul.f32 %v1215, %v83
    %v1231 = vmul.f32 %v1218, %v84
    %v1232 = vmul.f32 %v1221, %v85
    %v1233 = vmul.f32 %v1224, %v86
    %1234 = vmatpush.msra.mxu0 0.0
    %1235 = vmatpush.msra.mxu0 0.0
    %1236 = vmatpush.msra.mxu0 0.0
    %1237 = vmatpush.msra.mxu0 0.0
    %1238 = vmatpush.msra.mxu0 0.0
    %1239 = vmatpush.msra.mxu0 0.0
    %1240 = vmatpush.msra.mxu0 0.0
    %1241 = vmatpush.msra.mxu0 0.0
    %1242 = vmatpush.msra.mxu0 %v1233
    %1243 = vmatpush.msra.mxu0 %v1232
    %1244 = vmatpush.msra.mxu0 %v1231
    %1245 = vmatpush.msra.mxu0 %v1230
    %1246 = vmatpush.msra.mxu0 %v1229
    %1247 = vmatpush.msra.mxu0 %v1228
    %1248 = vmatpush.msra.mxu0 %v1227
    %1249 = vmatpush.msra.mxu0 %v1226
    %1250 = vmatmul.f32.gmra.mxu0 %v532
    %v1251 = vpop.f32.mrf.mxu0
    %v1252 = vadd.f32 0.0, %v1251
    %1253 = vmatmul.f32.gmra.mxu0 %v535
    %v1254 = vpop.f32.mrf.mxu0
    %v1255 = vadd.f32 0.0, %v1254
    %1256 = vdwg.mxu0
    %s1257 = scalar_lea.vmem %s9, 32
    %v1258 = vld [vmem:[%s1257] sm:$0xff]
    %v1259 = vld [vmem:[%s1257 + $0x8] sm:$0xff]
    %v1260 = vld [vmem:[%s1257 + $0x10] sm:$0xff]
    %v1261 = vld [vmem:[%s1257 + $0x18] sm:$0xff]
    %s1262 = scalar_lea.vmem %s10, 1
    %v1263 = vld [vmem:[%s1262] sm:$0x1]
    %v1265 = vperm.slane %v1263, 0
    %v1268 = vsel %vm99, %v1252, 0
    %v1271 = vsel %vm99, %v1255, 0
    %1273 = vmatpush.msra.mxu0 0.0
    %1274 = vmatpush.msra.mxu0 0.0
    %1275 = vmatpush.msra.mxu0 0.0
    %1276 = vmatpush.msra.mxu0 0.0
    %1277 = vmatpush.msra.mxu0 0.0
    %1278 = vmatpush.msra.mxu0 0.0
    %1279 = vmatpush.msra.mxu0 0.0
    %1280 = vmatpush.msra.mxu0 0.0
    %1281 = vmatpush.msra.mxu0 0.0
    %1282 = vmatpush.msra.mxu0 0.0
    %1283 = vmatpush.msra.mxu0 0.0
    %1284 = vmatpush.msra.mxu0 0.0
    %1285 = vmatpush.msra.mxu0 %v1261
    %1286 = vmatpush.msra.mxu0 %v1260
    %1287 = vmatpush.msra.mxu0 %v1259
    %1288 = vmatpush.msra.mxu0 %v1258
    %1289 = vmatmul.f32.gmra.mxu0 %v1268
    %v1290 = vpop.f32.mrf.mxu0
    %v1291 = vadd.f32 %v1265, %v1290
    %1292 = vmatmul.f32.gmra.mxu0 %v1271
    %v1293 = vpop.f32.mrf.mxu0
    %v1294 = vadd.f32 %v1265, %v1293
    %1295 = vdwg.mxu0
    %v1296 = vadd.f32 %v1291, %v886
    %v1297 = vadd.f32 %v1294, %v887
    %s1298 = scalar_lea.vmem %s11, 1
    %v1299 = vld [vmem:[%s1298] sm:$0x1]
    %s1300 = scalar_lea.vmem %s12, 1
    %v1301 = vld [vmem:[%s1300] sm:$0x1]
    %v1302 = vsel %vm99, %v1296, 0.0
    %1303 = vadd.xlane.f32.xlu0 %v1302
    %v1304 = vpop.xlane.xlu0 %1303
    %v1305 = vsel %vm99, %v1297, 0.0
    %1306 = vadd.xlane.f32.xlu0 %v1305
    %v1307 = vpop.xlane.xlu0 %1306
    %v1308 = vmul.f32 %v1304, %v112
    %v1309 = vmul.f32 %v1307, %v112
    %v1310 = vsub.f32 %v1296, %v1308
    %v1311 = vsub.f32 %v1297, %v1309
    %v1312 = vmul.f32 %v1310, %v1310
    %v1313 = vmul.f32 %v1311, %v1311
    %v1314 = vsel %vm99, %v1312, 0.0
    %1315 = vadd.xlane.f32.xlu0 %v1314
    %v1316 = vpop.xlane.xlu0 %1315
    %v1317 = vsel %vm99, %v1313, 0.0
    %1318 = vadd.xlane.f32.xlu0 %v1317
    %v1319 = vpop.xlane.xlu0 %1318
    %v1320 = vmul.f32 %v1316, %v112
    %v1321 = vmul.f32 %v1319, %v112
    %v1322 = vadd.f32 %v1320, 1e-12
    %v1323 = vadd.f32 %v1321, 1e-12
    %v1324 = vrsqrt.pop %v1322
    %v1325 = vmul.f32 %v1324, %v1322
    %v1326 = vmul.f32 %v1325, %v1324
    %v1327 = vmul.f32 0.5, %v1326
    %v1328 = vsub.f32 1.5, %v1327
    %v1329 = vmul.f32 %v1324, %v1328
    %vm1330 = vweird.f32 %v1322
    %vm1331 = vweird.f32 %v1324
    %vm1332 = vmor %vm1330, %vm1331
    %v1333 = vsel %vm1332, %v1324, %v1329
    %v1334 = vrsqrt.pop %v1323
    %v1335 = vmul.f32 %v1334, %v1323
    %v1336 = vmul.f32 %v1335, %v1334
    %v1337 = vmul.f32 0.5, %v1336
    %v1338 = vsub.f32 1.5, %v1337
    %v1339 = vmul.f32 %v1334, %v1338
    %vm1340 = vweird.f32 %v1323
    %vm1341 = vweird.f32 %v1334
    %vm1342 = vmor %vm1340, %vm1341
    %v1343 = vsel %vm1342, %v1334, %v1339
    %v1344 = vmul.f32 %v1310, %v1333
    %v1345 = vmul.f32 %v1311, %v1343
    %v1347 = vperm.slane %v1299, 0
    %v1349 = vmul.f32 %v1344, %v1347
    %v1350 = vmul.f32 %v1345, %v1347
    %v1352 = vperm.slane %v1301, 0
    %v1354 = vadd.f32 %v1349, %v1352
    %v1355 = vadd.f32 %v1350, %v1352
    %s1356 = scalar_lea.vmem %s13, 32
    %v1357 = vld [vmem:[%s1356] sm:$0xff]
    %v1358 = vld [vmem:[%s1356 + $0x8] sm:$0xff]
    %v1359 = vld [vmem:[%s1356 + $0x10] sm:$0xff]
    %v1360 = vld [vmem:[%s1356 + $0x18] sm:$0xff]
    %s1361 = scalar_lea.vmem %s14, 1
    %v1362 = vld [vmem:[%s1361] sm:$0x1]
    %v1364 = vperm.slane %v1362, 0
    %v1367 = vsel %vm99, %v1354, 0
    %v1370 = vsel %vm99, %v1355, 0
    %1372 = vmatpush.msra.mxu0 0.0
    %1373 = vmatpush.msra.mxu0 0.0
    %1374 = vmatpush.msra.mxu0 0.0
    %1375 = vmatpush.msra.mxu0 0.0
    %1376 = vmatpush.msra.mxu0 0.0
    %1377 = vmatpush.msra.mxu0 0.0
    %1378 = vmatpush.msra.mxu0 0.0
    %1379 = vmatpush.msra.mxu0 0.0
    %1380 = vmatpush.msra.mxu0 0.0
    %1381 = vmatpush.msra.mxu0 0.0
    %1382 = vmatpush.msra.mxu0 0.0
    %1383 = vmatpush.msra.mxu0 0.0
    %1384 = vmatpush.msra.mxu0 %v1360
    %1385 = vmatpush.msra.mxu0 %v1359
    %1386 = vmatpush.msra.mxu0 %v1358
    %1387 = vmatpush.msra.mxu0 %v1357
    %1388 = vmatmul.f32.gmra.mxu0 %v1367
    %v1389 = vpop.f32.mrf.mxu0
    %v1390 = vadd.f32 %v1364, %v1389
    %1391 = vmatmul.f32.gmra.mxu0 %v1370
    %v1392 = vpop.f32.mrf.mxu0
    %v1393 = vadd.f32 %v1364, %v1392
    %1394 = vdwg.mxu0
    %v1395 = vmul.f32 %v1390, 0.5
    %v1396 = vmul.f32 %v1393, 0.5
    %v1397 = vmul.f32 %v1390, %v700
    %v1398 = vmul.f32 %v1393, %v700
    %v1399 = vmul.f32 %v1397, %v1397
    %v1400 = vmin.f32 16.0, %v1399
    %v1401 = vmul.f32 %v1400, 2.1237322e-06
    %v1402 = vadd.f32 %v1401, 0.00028619796
    %v1403 = vmul.f32 %v1400, %v1402
    %v1404 = vadd.f32 %v1403, 0.0036580483
    %v1405 = vmul.f32 %v1400, %v1404
    %v1406 = vadd.f32 %v1405, 0.05243302
    %v1407 = vmul.f32 %v1400, %v1406
    %v1408 = vadd.f32 %v1407, 0.18741608
    %v1409 = vmul.f32 %v1400, %v1408
    %v1410 = vadd.f32 %v1409, 1.1283791
    %v1411 = vmul.f32 %v1397, %v1410
    %v1412 = vmul.f32 %v1400, 3.8918573e-05
    %v1413 = vadd.f32 %v1412, 0.001143296
    %v1414 = vmul.f32 %v1400, %v1413
    %v1415 = vadd.f32 %v1414, 0.014752088
    %v1416 = vmul.f32 %v1400, %v1415
    %v1417 = vadd.f32 %v1416, 0.112945676
    %v1418 = vmul.f32 %v1400, %v1417
    %v1419 = vadd.f32 %v1418, 0.4994258
    %v1420 = vmul.f32 %v1400, %v1419
    %v1421 = vadd.f32 %v1420, 1.0
    %v1422 = vrcp.pop %v1421
    %v1423 = vmul.f32 %v1421, %v1422
    %v1424 = vsub.f32 1.0, %v1423
    %v1425 = vmul.f32 %v1422, %v1424
    %v1426 = vadd.f32 %v1422, %v1425
    %vm1427 = vweird.f32 %v1421
    %vm1428 = vweird.f32 %v1422
    %vm1429 = vmor %vm1427, %vm1428
    %v1430 = vsel %vm1429, %v1422, %v1426
    %v1431 = vand.u32 2147483647, %v1421
    %vm1432 = vcmp.eq.f32.partialorder %v1431, 8.507059e+37
    %v1433 = vand.u32 %v1421, 2147483648
    %v1434 = vor.u32 1.1754944e-38, %v1433
    %v1435 = vsel %vm1432, %v1434, %v1430
    %v1436 = vmul.f32 %v1411, %v1435
    %v1437 = vmin.f32 %v1436, 1.0
    %v1438 = vmax.f32 %v1437, -1.0
    %v1439 = vmul.f32 %v1398, %v1398
    %v1440 = vmin.f32 16.0, %v1439
    %v1441 = vmul.f32 %v1440, 2.1237322e-06
    %v1442 = vadd.f32 %v1441, 0.00028619796
    %v1443 = vmul.f32 %v1440, %v1442
    %v1444 = vadd.f32 %v1443, 0.0036580483
    %v1445 = vmul.f32 %v1440, %v1444
    %v1446 = vadd.f32 %v1445, 0.05243302
    %v1447 = vmul.f32 %v1440, %v1446
    %v1448 = vadd.f32 %v1447, 0.18741608
    %v1449 = vmul.f32 %v1440, %v1448
    %v1450 = vadd.f32 %v1449, 1.1283791
    %v1451 = vmul.f32 %v1398, %v1450
    %v1452 = vmul.f32 %v1440, 3.8918573e-05
    %v1453 = vadd.f32 %v1452, 0.001143296
    %v1454 = vmul.f32 %v1440, %v1453
    %v1455 = vadd.f32 %v1454, 0.014752088
    %v1456 = vmul.f32 %v1440, %v1455
    %v1457 = vadd.f32 %v1456, 0.112945676
    %v1458 = vmul.f32 %v1440, %v1457
    %v1459 = vadd.f32 %v1458, 0.4994258
    %v1460 = vmul.f32 %v1440, %v1459
    %v1461 = vadd.f32 %v1460, 1.0
    %v1462 = vrcp.pop %v1461
    %v1463 = vmul.f32 %v1461, %v1462
    %v1464 = vsub.f32 1.0, %v1463
    %v1465 = vmul.f32 %v1462, %v1464
    %v1466 = vadd.f32 %v1462, %v1465
    %vm1467 = vweird.f32 %v1461
    %vm1468 = vweird.f32 %v1462
    %vm1469 = vmor %vm1467, %vm1468
    %v1470 = vsel %vm1469, %v1462, %v1466
    %v1471 = vand.u32 2147483647, %v1461
    %vm1472 = vcmp.eq.f32.partialorder %v1471, 8.507059e+37
    %v1473 = vand.u32 %v1461, 2147483648
    %v1474 = vor.u32 1.1754944e-38, %v1473
    %v1475 = vsel %vm1472, %v1474, %v1470
    %v1476 = vmul.f32 %v1451, %v1475
    %v1477 = vmin.f32 %v1476, 1.0
    %v1478 = vmax.f32 %v1477, -1.0
    %v1479 = vadd.f32 %v1438, 1.0
    %v1480 = vadd.f32 %v1478, 1.0
    %v1481 = vmul.f32 %v1395, %v1479
    %v1482 = vmul.f32 %v1396, %v1480
    %s1483 = scalar_lea.vmem %s15, 128
    %v1484 = vld [vmem:[%s1483] sm:$0xff]
    %v1485 = vld [vmem:[%s1483 + $0x8] sm:$0xff]
    %v1486 = vld [vmem:[%s1483 + $0x10] sm:$0xff]
    %v1487 = vld [vmem:[%s1483 + $0x18] sm:$0xff]
    %v1488 = vld [vmem:[%s1483 + $0x20] sm:$0xff]
    %v1489 = vld [vmem:[%s1483 + $0x28] sm:$0xff]
    %v1490 = vld [vmem:[%s1483 + $0x30] sm:$0xff]
    %v1491 = vld [vmem:[%s1483 + $0x38] sm:$0xff]
    %v1492 = vld [vmem:[%s1483 + $0x40] sm:$0xff]
    %v1493 = vld [vmem:[%s1483 + $0x48] sm:$0xff]
    %v1494 = vld [vmem:[%s1483 + $0x50] sm:$0xff]
    %v1495 = vld [vmem:[%s1483 + $0x58] sm:$0xff]
    %v1496 = vld [vmem:[%s1483 + $0x60] sm:$0xff]
    %v1497 = vld [vmem:[%s1483 + $0x68] sm:$0xff]
    %v1498 = vld [vmem:[%s1483 + $0x70] sm:$0xff]
    %v1499 = vld [vmem:[%s1483 + $0x78] sm:$0xff]
    %s1500 = scalar_lea.vmem %s16, 1
    %v1501 = vld [vmem:[%s1500] sm:$0x1]
    %v1503 = vperm.slane %v1501, 0
    %1505 = vmatpush.msra.mxu0 %v1499
    %1506 = vmatpush.msra.mxu0 %v1498
    %1507 = vmatpush.msra.mxu0 %v1497
    %1508 = vmatpush.msra.mxu0 %v1496
    %1509 = vmatpush.msra.mxu0 %v1495
    %1510 = vmatpush.msra.mxu0 %v1494
    %1511 = vmatpush.msra.mxu0 %v1493
    %1512 = vmatpush.msra.mxu0 %v1492
    %1513 = vmatpush.msra.mxu0 %v1491
    %1514 = vmatpush.msra.mxu0 %v1490
    %1515 = vmatpush.msra.mxu0 %v1489
    %1516 = vmatpush.msra.mxu0 %v1488
    %1517 = vmatpush.msra.mxu0 %v1487
    %1518 = vmatpush.msra.mxu0 %v1486
    %1519 = vmatpush.msra.mxu0 %v1485
    %1520 = vmatpush.msra.mxu0 %v1484
    %1521 = vmatmul.f32.gmra.mxu0 %v1481
    %v1522 = vpop.f32.mrf.mxu0
    %v1523 = vadd.f32 %v1503, %v1522
    %1524 = vmatmul.f32.gmra.mxu0 %v1482
    %v1525 = vpop.f32.mrf.mxu0
    %v1526 = vadd.f32 %v1503, %v1525
    %1527 = vdwg.mxu0
    %v1528 = vadd.f32 %v1523, %v1354
    %v1529 = vadd.f32 %v1526, %v1355
    %s1530 = scalar_lea.vmem %s17, 1
    %v1531 = vld [vmem:[%s1530] sm:$0x1]
    %s1532 = scalar_lea.vmem %s18, 1
    %v1533 = vld [vmem:[%s1532] sm:$0x1]
    %v1534 = vsel %vm99, %v1528, 0.0
    %1535 = vadd.xlane.f32.xlu0 %v1534
    %v1536 = vpop.xlane.xlu0 %1535
    %v1537 = vsel %vm99, %v1529, 0.0
    %1538 = vadd.xlane.f32.xlu0 %v1537
    %v1539 = vpop.xlane.xlu0 %1538
    %v1540 = vmul.f32 %v1536, %v112
    %v1541 = vmul.f32 %v1539, %v112
    %v1542 = vsub.f32 %v1528, %v1540
    %v1543 = vsub.f32 %v1529, %v1541
    %v1544 = vmul.f32 %v1542, %v1542
    %v1545 = vmul.f32 %v1543, %v1543
    %v1546 = vsel %vm99, %v1544, 0.0
    %1547 = vadd.xlane.f32.xlu0 %v1546
    %v1548 = vpop.xlane.xlu0 %1547
    %v1549 = vsel %vm99, %v1545, 0.0
    %1550 = vadd.xlane.f32.xlu0 %v1549
    %v1551 = vpop.xlane.xlu0 %1550
    %v1552 = vmul.f32 %v1548, %v112
    %v1553 = vmul.f32 %v1551, %v112
    %v1554 = vadd.f32 %v1552, 1e-12
    %v1555 = vadd.f32 %v1553, 1e-12
    %v1556 = vrsqrt.pop %v1554
    %v1557 = vmul.f32 %v1556, %v1554
    %v1558 = vmul.f32 %v1557, %v1556
    %v1559 = vmul.f32 0.5, %v1558
    %v1560 = vsub.f32 1.5, %v1559
    %v1561 = vmul.f32 %v1556, %v1560
    %vm1562 = vweird.f32 %v1554
    %vm1563 = vweird.f32 %v1556
    %vm1564 = vmor %vm1562, %vm1563
    %v1565 = vsel %vm1564, %v1556, %v1561
    %v1566 = vrsqrt.pop %v1555
    %v1567 = vmul.f32 %v1566, %v1555
    %v1568 = vmul.f32 %v1567, %v1566
    %v1569 = vmul.f32 0.5, %v1568
    %v1570 = vsub.f32 1.5, %v1569
    %v1571 = vmul.f32 %v1566, %v1570
    %vm1572 = vweird.f32 %v1555
    %vm1573 = vweird.f32 %v1566
    %vm1574 = vmor %vm1572, %vm1573
    %v1575 = vsel %vm1574, %v1566, %v1571
    %v1576 = vmul.f32 %v1542, %v1565
    %v1577 = vmul.f32 %v1543, %v1575
    %v1579 = vperm.slane %v1531, 0
    %v1581 = vmul.f32 %v1576, %v1579
    %v1582 = vmul.f32 %v1577, %v1579
    %v1584 = vperm.slane %v1533, 0
    %v1586 = vadd.f32 %v1581, %v1584
    %v1587 = vadd.f32 %v1582, %v1584
    %v1588 = vld [vmem:[%s19] sm:$0xff]
    %v1589 = vld [vmem:[%s19 + $0x8] sm:$0xff]
    %v1590 = vld [vmem:[%s19 + $0x10] sm:$0xff]
    %v1591 = vld [vmem:[%s19 + $0x18] sm:$0xff]
    %v1592 = vld [vmem:[%s20] sm:$0x1]
    %v1594 = vperm.slane %v1592, 0
    %v1597 = vsel %vm99, %v1586, 0
    %v1600 = vsel %vm99, %v1587, 0
    %1602 = vmatpush.msra.mxu0 0.0
    %1603 = vmatpush.msra.mxu0 0.0
    %1604 = vmatpush.msra.mxu0 0.0
    %1605 = vmatpush.msra.mxu0 0.0
    %1606 = vmatpush.msra.mxu0 0.0
    %1607 = vmatpush.msra.mxu0 0.0
    %1608 = vmatpush.msra.mxu0 0.0
    %1609 = vmatpush.msra.mxu0 0.0
    %1610 = vmatpush.msra.mxu0 0.0
    %1611 = vmatpush.msra.mxu0 0.0
    %1612 = vmatpush.msra.mxu0 0.0
    %1613 = vmatpush.msra.mxu0 0.0
    %1614 = vmatpush.msra.mxu0 %v1591
    %1615 = vmatpush.msra.mxu0 %v1590
    %1616 = vmatpush.msra.mxu0 %v1589
    %1617 = vmatpush.msra.mxu0 %v1588
    %1618 = vmatmul.f32.gmra.mxu0 %v1597
    %v1619 = vpop.f32.mrf.mxu0
    %v1620 = vadd.f32 %v1594, %v1619
    %1621 = vmatmul.f32.gmra.mxu0 %v1600
    %v1622 = vpop.f32.mrf.mxu0
    %v1623 = vadd.f32 %v1594, %v1622
    %1624 = vdwg.mxu0
    %1625 = vst [vmem:[#allocation2] sm:$0xff] %v1620
    %1626 = vst [vmem:[#allocation2 + $0x8] sm:$0xff] %v1623
    // Predicated region
    $region86: #{tpu_custom_call.1} parent=1 // pred_check
      _
    $region87: #{tpu_custom_call.1} parent=1 // pred_check_branch
      %1628 = sbr.rel (0) target = $region89
    $region88: #{tpu_custom_call.1} parent=1 // pred_region
      %1630 = vsyncadd [#allocation3], 0
      %s1631 = sshll.u32 [#allocation2], 4
      %s1632 = int_to_ptr.vmem [resolvable:$true] %s1631
      %s1633 = sshll.u32 %s21, 4
      %s1634 = int_to_ptr.hbm [resolvable:$true] %s1633
      %1639 = dma.vmem_to_hbm [thread:$0]  %s1632, 256, %s1634, [#allocation3], 128, 128, 8
    $region89: #{tpu_custom_call.1} parent=1 // pred_fallthru
      _
    // Predicated region
    $region90: #{tpu_custom_call.1} parent=1 // pred_check
      _
    $region91: #{tpu_custom_call.1} parent=1 // pred_check_branch
      %1641 = sbr.rel (0) target = $region93
    $region92: #{tpu_custom_call.1} parent=1 // pred_region
      %1643 = dma.done [#allocation3], 256
    $region93: #{tpu_custom_call.1} parent=1 // pred_fallthru
      _
    %1644 = vsyncpa [#allocation3], 1

</llo_original>
